<compile_context>
chip_gen: v7x
topology: tpu7x:2x2x1
jax: 0.10.0
libtpu: 0.0.40
codegen_flags: <defaults>
</compile_context>

<pallas_src>
import functools
from typing import NamedTuple

import jax
import jax.numpy as jnp
import numpy as np
from jax.experimental import pallas as pl
from jax.experimental.pallas import tpu as pltpu


def _cdiv(a, b):
    return (a + b - 1) // b


def _round_up(v, m):
    return _cdiv(v, m) * m


class EnsembleConfig(NamedTuple):
    input_size: int
    num_classes: int
    num_classifiers: int
    k_neighbors: int
    tanh_factor: float
    m_pad: int
    c_pad: int
    mc_pad: int


def ensemble_kernel(x_ref, wk_ref, wr_ref, br_ref, e_ref, g_ref, out_ref, *,
                    num_classifiers, num_classes, k_neighbors, tanh_factor,
                    m_pad, c_pad, mc_pad):
    M, C, K = num_classifiers, num_classes, k_neighbors
    Mp, Cp, MCp = m_pad, c_pad, mc_pad
    inv_tf = 1.0 / tanh_factor
    NEG_BIG = -1.0e30

    xf = x_ref[...]                                    # (TB, D) float32
    tb = xf.shape[0]

    # ---- cosine similarity (f32 path; L2-normalize folded into rsqrt) -----
    cos_raw = jnp.dot(xf, wk_ref[...], preferred_element_type=jnp.float32)
    sumsq = jnp.sum(xf * xf, axis=1, keepdims=True)
    inv_norm = jax.lax.rsqrt(jnp.maximum(sumsq, 1e-24))   # ~ 1/max(||x||,1e-12)
    cos_sim = cos_raw * inv_norm                       # (TB, Mp); padded cols 0
    cos_dist = 1.0 - cos_sim
    out_ref[:, 3 * Cp:3 * Cp + Mp] = cos_dist          # store early (overlap)

    # ---- hard top-k via packed (distance | column) order-preserving key ---
    # One cross-lane min per pass; lowest-index tie-break preserved.
    col = jax.lax.broadcasted_iota(jnp.int32, (tb, Mp), 1)
    s_bits = max(1, (Mp - 1).bit_length())
    lo_mask = jnp.int32((1 << s_bits) - 1)
    hi_mask = jnp.int32(-(1 << s_bits))
    SENT = jnp.int32(2147483647)
    bits = pltpu.bitcast(cos_dist, jnp.int32)
    mono = jnp.where(bits < 0, bits ^ jnp.int32(2147483647), bits)
    work = jnp.where(col < M, (mono & hi_mask) | col, SENT)
    knn = jnp.zeros((tb, Mp), jnp.float32)
    for _ in range(K):                                 # K is small and static
        cur = jnp.min(work, axis=1, keepdims=True)     # single XLU reduce/pass
        sel = (col == (cur & lo_mask)) & (cur != SENT)
        knn = knn + sel.astype(jnp.float32)
        work = jnp.where(sel, SENT, work)
    out_ref[:, 3 * Cp + Mp:3 * Cp + 2 * Mp] = knn      # store early (overlap)

    # ---- fused [Wv | Wt | Ww] matmul (compute dtype operands, f32 acc) ----
    xc = xf.astype(wr_ref.dtype)
    y = jnp.dot(xc, wr_ref[...], preferred_element_type=jnp.float32) + br_ref[...]

    # ---- VanillaClassifier: masked log-softmax over the C valid classes ---
    ccol = jax.lax.broadcasted_iota(jnp.int32, (tb, Cp), 1)
    lv = y[:, :Cp]
    lv_m = jnp.where(ccol < C, lv, NEG_BIG)
    lv_max = jnp.max(lv_m, axis=1, keepdims=True)
    lse = jnp.log(jnp.sum(jnp.exp(lv_m - lv_max), axis=1, keepdims=True)) + lv_max
    out_ref[:, 2 * Cp:3 * Cp] = lv - lse               # padded cols sliced later

    # ---- TanhClassifier (epilogue stays f32: no bf16 EUP on v5e) ----------
    lt = y[:, Cp:2 * Cp]
    out_ref[:, Cp:2 * Cp] = jnp.tanh(lt * inv_tf) * tanh_factor

    # ---- M WeakLearners + knn/cosine-weighted ensemble reduction ----------
    lw = y[:, 2 * Cp:]
    ow = jnp.tanh(lw * inv_tf) * tanh_factor           # (TB, MCp); padded cols 0
    w_num = cos_sim * knn                              # (TB, Mp)
    den = jnp.sum(w_num, axis=1, keepdims=True)        # (TB, 1)
    w_exp = jnp.dot(w_num.astype(e_ref.dtype), e_ref[...],
                    preferred_element_type=jnp.float32)        # per-column weight
    num = jnp.dot((ow * w_exp).astype(g_ref.dtype), g_ref[...],
                  preferred_element_type=jnp.float32)           # sum over learners
    inv_den = pl.reciprocal(den, approx=True)
    inv_den = inv_den * (2.0 - den * inv_den)          # one Newton step
    out_ref[:, :Cp] = num * inv_den                    # (ref also divides by a
                                                       #  possibly-zero den)


def prepare_ensemble_params(keys, wv, bv, wt, bt, ww, bw, *, k_neighbors,
                            tanh_factor, compute_dtype=jnp.bfloat16):
    """One-time parameter fusion (hoisted out of the per-forward path)."""
    M, D = keys.shape
    C = wv.shape[1]
    LANE = 128
    Mp = _round_up(M, LANE)
    Cp = _round_up(C, LANE)
    MCp = _round_up(M * C, LANE)
    NREST = 2 * Cp + MCp
    f32 = jnp.float32

    # keys block stays f32 so the cosine / top-k path keeps full precision.
    wk = jnp.zeros((D, Mp), f32).at[:, :M].set(keys.T.astype(f32))

    wr = jnp.zeros((D, NREST), f32)
    wr = wr.at[:, :C].set(wv.astype(f32))
    wr = wr.at[:, Cp:Cp + C].set(wt.astype(f32))
    wr = wr.at[:, 2 * Cp:2 * Cp + M * C].set(ww.astype(f32))
    wr = wr.astype(compute_dtype)

    br = jnp.zeros((1, NREST), f32)
    br = br.at[:, :C].set(bv.astype(f32).reshape(1, C))
    br = br.at[:, Cp:Cp + C].set(bt.astype(f32).reshape(1, C))
    br = br.at[:, 2 * Cp:2 * Cp + M * C].set(bw.astype(f32).reshape(1, M * C))

    # Constant 0/1 expansion (E) and group-sum (G) matrices (exact in bf16).
    j = jnp.arange(MCp)
    m_idx, c_idx, in_rng = j // C, j % C, j < M * C
    e_mat = ((jnp.arange(Mp)[:, None] == m_idx[None, :]) &
             in_rng[None, :]).astype(compute_dtype)            # (Mp, MCp)
    g_mat = ((c_idx[:, None] == jnp.arange(Cp)[None, :]) &
             in_rng[:, None]).astype(compute_dtype)            # (MCp, Cp)

    params = dict(wk=wk, wr=wr, br=br, e_mat=e_mat, g_mat=g_mat)
    config = EnsembleConfig(input_size=D, num_classes=C, num_classifiers=M,
                            k_neighbors=int(k_neighbors),
                            tanh_factor=float(tanh_factor),
                            m_pad=Mp, c_pad=Cp, mc_pad=MCp)
    return params, config


def _pick_batch_tile(batch, max_tile):
    max_tile = max(8, _round_up(min(max_tile, max(batch, 1)), 8))
    n_tiles = _cdiv(batch, max_tile)
    if n_tiles == 1 and batch >= 16:
        n_tiles = 2            # give both v7x TensorCores a grid step
    return _round_up(_cdiv(batch, n_tiles), 8)


def ensemble_forward(x, params, config, *, batch_tile=256):
    """x: (B, D) encoded features -> (ensemble, tanh, vanilla_logsoftmax,
    cos_distance, knn_similarity); matches EnsembleE2EModule.forward with
    x_is_encoded=True (hard top-k approximation of DKNN)."""
    B, D = x.shape
    M, C = config.num_classifiers, config.num_classes
    Mp, Cp, MCp = config.m_pad, config.c_pad, config.mc_pad
    NREST = 2 * Cp + MCp
    OUT = 3 * Cp + 2 * Mp

    TB = _pick_batch_tile(B, batch_tile)
    Bp = _round_up(B, TB)
    xp = jnp.pad(x.astype(jnp.float32), ((0, Bp - B), (0, 0)))

    kern = functools.partial(
        ensemble_kernel, num_classifiers=M, num_classes=C,
        k_neighbors=config.k_neighbors, tanh_factor=config.tanh_factor,
        m_pad=Mp, c_pad=Cp, mc_pad=MCp)

    cdt_bytes = jnp.dtype(params["wr"].dtype).itemsize
    # Resident-VMEM budget: constants single-buffered, x/out double-buffered,
    # plus the live (TB, NREST)/(TB, MCp) f32 epilogue slabs.
    vmem_bytes = (
        D * Mp * 4 + (D * NREST + Mp * MCp + MCp * Cp) * cdt_bytes + NREST * 4
        + 2 * TB * D * 4 + 2 * TB * OUT * 4
        + TB * (NREST + 2 * MCp + 6 * Mp + 6 * Cp) * 4)
    vmem_bytes = min(128 << 20, max(int(vmem_bytes * 1.25) + (2 << 20), 32 << 20))

    grid_i = lambda i: (i, 0)
    const = lambda i: (0, 0)

    def call(const_spec):
        return pl.pallas_call(
            kern,
            out_shape=jax.ShapeDtypeStruct((Bp, OUT), jnp.float32),
            grid=(Bp // TB,),
            in_specs=[
                pl.BlockSpec((TB, D), grid_i),          # x tile (pipelined)
                const_spec((D, Mp)),                    # keys block (f32)
                const_spec((D, NREST)),                 # fused [Wv|Wt|Ww]
                const_spec((1, NREST)),                 # fused biases
                const_spec((Mp, MCp)),                  # expansion matrix E
                const_spec((MCp, Cp)),                  # group-sum matrix G
            ],
            out_specs=pl.BlockSpec((TB, OUT), grid_i),
            compiler_params=pltpu.CompilerParams(
                dimension_semantics=("parallel",),
                vmem_limit_bytes=vmem_bytes),
        )(xp, params["wk"], params["wr"], params["br"],
          params["e_mat"], params["g_mat"])

    try:
        # Constants never change across the batch grid: single-buffer them
        # (halves their VMEM footprint; biggest win on v7x's 64 MiB VMEM).
        out = call(lambda shp: pl.BlockSpec(shp, const,
                                            pipeline_mode=pl.Buffered(1)))
    except Exception:
        # Fallback if this JAX build rejects Buffered(1) on pallas_call specs.
        out = call(lambda shp: pl.BlockSpec(shp, const))

    ens = out[:B, 0:C]
    tanh_out = out[:B, Cp:Cp + C]
    van = out[:B, 2 * Cp:2 * Cp + C]
    dist = out[:B, 3 * Cp:3 * Cp + M]
    knn = out[:B, 3 * Cp + Mp:3 * Cp + Mp + M]
    return ens, tanh_out, van, dist, knn


def reference_forward(x, keys, wv, bv, wt, bt, ww, bw, *, k_neighbors, tanh_factor):
    """Pure-JAX reference mirroring the PyTorch forward()."""
    B, _ = x.shape
    M = keys.shape[0]
    C = wv.shape[1]
    xn = x / jnp.maximum(jnp.linalg.norm(x, axis=1, keepdims=True), 1e-12)
    cos = xn @ keys.T
    dist = 1.0 - cos
    idx = jnp.argsort(dist, axis=1)[:, :k_neighbors]
    knn = jnp.zeros_like(dist).at[jnp.arange(B)[:, None], idx].set(1.0)
    van = jax.nn.log_softmax(x @ wv + bv, axis=1)
    tanh_out = jnp.tanh((x @ wt + bt) / tanh_factor) * tanh_factor
    ow = (jnp.tanh((x @ ww + bw) / tanh_factor) * tanh_factor).reshape(B, M, C)
    out_k = ow * knn[:, :, None]
    cos_k = (cos * knn)[:, :, None]
    ens = jnp.sum(out_k * cos_k, axis=1) / jnp.sum(cos_k, axis=1)
    return ens, tanh_out, van, dist, knn


if __name__ == "__main__":
    # Small, deterministic synthetic configuration.
    B = 4            # batch
    D = 32           # input_size (encoded feature dim)
    C = 10           # num_classes
    M = 8            # num_classifiers
    K = 3            # k_neighbors
    TF = 10.0        # tanh_factor

    key = jax.random.PRNGKey(0)
    kx, kk, kwv, kbv, kwt, kbt, kww, kbw = jax.random.split(key, 8)

    x = jax.random.normal(kx, (B, D), jnp.float32)

    keys_raw = jax.random.normal(kk, (M, D), jnp.float32)
    keys = keys_raw / jnp.maximum(
        jnp.linalg.norm(keys_raw, axis=1, keepdims=True), 1e-12)

    wv = jax.random.normal(kwv, (D, C), jnp.float32) * np.sqrt(0.1 / D)
    bv = jax.random.normal(kbv, (1, C), jnp.float32) * 0.01
    wt = jax.random.normal(kwt, (D, C), jnp.float32) * np.sqrt(0.1 / D)
    bt = jax.random.normal(kbt, (1, C), jnp.float32) * 0.01
    ww = jax.random.normal(kww, (D, M * C), jnp.float32) * np.sqrt(1.0 / D)
    bw = jax.random.normal(kbw, (1, M * C), jnp.float32) * 0.01

    refs = reference_forward(x, keys, wv, bv, wt, bt, ww, bw,
                             k_neighbors=K, tanh_factor=TF)
    names = ["ensemble", "tanh", "vanilla_logsoftmax", "cos_distance", "knn_sim"]

    # f32 MXU path: tight tolerance vs the pure-JAX reference.
    params32, cfg = prepare_ensemble_params(
        keys, wv, bv, wt, bt, ww, bw, k_neighbors=K, tanh_factor=TF,
        compute_dtype=jnp.float32)
    outs32 = jax.block_until_ready(ensemble_forward(x, params32, cfg))
    for name, o, r in zip(names, outs32, refs):
        np.testing.assert_allclose(np.asarray(o), np.asarray(r),
                                   rtol=1e-3, atol=1e-3, err_msg=name + " (f32)")

    # bf16 MXU-operand path (default; keys/cos/top-k stay f32): looser
    # tolerance on the bf16-matmul outputs, tight on the f32 cos/knn path.
    params16, cfg16 = prepare_ensemble_params(
        keys, wv, bv, wt, bt, ww, bw, k_neighbors=K, tanh_factor=TF,
        compute_dtype=jnp.bfloat16)
    outs16 = jax.block_until_ready(ensemble_forward(x, params16, cfg16))
    tols = [(5e-2, 5e-2), (5e-2, 5e-2), (5e-2, 5e-2), (1e-3, 1e-3), (1e-3, 1e-3)]
    for name, o, r, (rt, at) in zip(names, outs16, refs, tols):
        np.testing.assert_allclose(np.asarray(o), np.asarray(r),
                                   rtol=rt, atol=at, err_msg=name + " (bf16)")

    print("KERNEL_OK")
</pallas_src>

<mosaic_0001>
module attributes {stable_mosaic.version = 11 : i64} {
  func.func @ensemble_kernel(%arg0: i32, %arg1: memref<8x32xf32, #tpu.memory_space<vmem>>, %arg2: memref<32x128xf32, #tpu.memory_space<vmem>>, %arg3: memref<32x384xf32, #tpu.memory_space<vmem>>, %arg4: memref<1x384xf32, #tpu.memory_space<vmem>>, %arg5: memref<128x128xf32, #tpu.memory_space<vmem>>, %arg6: memref<128x128xf32, #tpu.memory_space<vmem>>, %arg7: memref<8x640xf32, #tpu.memory_space<vmem>>) attributes {dimension_semantics = [#tpu.dimension_semantics<parallel>], iteration_bounds = array<i64: 1>, scalar_prefetch = 0 : i64, scratch_operands = 0 : i64, tpu.core_type = #tpu.core_type<tc>, window_params = [{transform_indices = @transform_0, window_bounds = array<i64: 8, 32>}, {pipeline_mode = #tpu.pipeline_mode<synchronous>, transform_indices = @transform_1, window_bounds = array<i64: 32, 128>}, {pipeline_mode = #tpu.pipeline_mode<synchronous>, transform_indices = @transform_2, window_bounds = array<i64: 32, 384>}, {pipeline_mode = #tpu.pipeline_mode<synchronous>, transform_indices = @transform_3, window_bounds = array<i64: 1, 384>}, {pipeline_mode = #tpu.pipeline_mode<synchronous>, transform_indices = @transform_4, window_bounds = array<i64: 128, 128>}, {pipeline_mode = #tpu.pipeline_mode<synchronous>, transform_indices = @transform_5, window_bounds = array<i64: 128, 128>}, {transform_indices = @transform_6, window_bounds = array<i64: 8, 640>}]} {
    %c0 = arith.constant 0 : index
    %c0_0 = arith.constant 0 : index
    %0 = vector.load %arg1[%c0, %c0_0] : memref<8x32xf32, #tpu.memory_space<vmem>>, vector<8x32xf32>
    %c0_1 = arith.constant 0 : index
    %c0_2 = arith.constant 0 : index
    %1 = vector.load %arg2[%c0_1, %c0_2] : memref<32x128xf32, #tpu.memory_space<vmem>>, vector<32x128xf32>
    %cst = arith.constant dense<0.000000e+00> : vector<8x128xf32>
    %2 = tpu.matmul %0, %1, %cst {dimension_numbers = #tpu.dot_dimension_numbers<[1], [0], [0], [1], [0, 0, 1, 1], [], []>} : vector<8x32xf32>, vector<32x128xf32>, vector<8x128xf32> -> vector<8x128xf32>
    %3 = arith.mulf %0, %0 : vector<8x32xf32>
    %cst_3 = arith.constant dense<0.000000e+00> : vector<8xf32>
    %4 = vector.multi_reduction <add>, %3, %cst_3 [1] : vector<8x32xf32> to vector<8xf32>
    %5 = vector.shape_cast %4 : vector<8xf32> to vector<8x1xf32>
    %cst_4 = arith.constant 1.000000e-24 : f32
    %6 = vector.broadcast %cst_4 : f32 to vector<8x1xf32>
    %7 = arith.maximumf %5, %6 : vector<8x1xf32>
    %8 = math.rsqrt %7 : vector<8x1xf32>
    %9 = vector.broadcast %8 : vector<8x1xf32> to vector<8x128xf32>
    %10 = arith.mulf %2, %9 : vector<8x128xf32>
    %cst_5 = arith.constant 1.000000e+00 : f32
    %11 = vector.broadcast %cst_5 : f32 to vector<8x128xf32>
    %12 = arith.subf %11, %10 : vector<8x128xf32>
    %c0_6 = arith.constant 0 : index
    %c384 = arith.constant 384 : index
    %13 = vector.load %arg7[%c0_6, %c384] : memref<8x640xf32, #tpu.memory_space<vmem>>, vector<8x128xf32>
    tpu.vector_store %arg7[%c0_6, %c384], %12 {strides = array<i32>} : memref<8x640xf32, #tpu.memory_space<vmem>>, vector<8x128xf32>,
    %14 = tpu.iota {dimensions = array<i32: 1>} : vector<8x128xi32>
    %15 = tpu.bitcast %12 : vector<8x128xf32> -> vector<8x128xi32>
    %c0_i32 = arith.constant 0 : i32
    %16 = vector.broadcast %c0_i32 : i32 to vector<8x128xi32>
    %17 = arith.cmpi slt, %15, %16 : vector<8x128xi32>
    %c2147483647_i32 = arith.constant 2147483647 : i32
    %18 = vector.broadcast %c2147483647_i32 : i32 to vector<8x128xi32>
    %19 = arith.xori %15, %18 : vector<8x128xi32>
    %20 = arith.select %17, %19, %15 : vector<8x128xi1>, vector<8x128xi32>
    %c8_i32 = arith.constant 8 : i32
    %21 = vector.broadcast %c8_i32 : i32 to vector<8x128xi32>
    %22 = arith.cmpi slt, %14, %21 : vector<8x128xi32>
    %c-128_i32 = arith.constant -128 : i32
    %23 = vector.broadcast %c-128_i32 : i32 to vector<8x128xi32>
    %24 = arith.andi %20, %23 : vector<8x128xi32>
    %25 = arith.ori %24, %14 : vector<8x128xi32>
    %c2147483647_i32_7 = arith.constant 2147483647 : i32
    %26 = vector.broadcast %c2147483647_i32_7 : i32 to vector<8x128xi32>
    %27 = arith.select %22, %25, %26 : vector<8x128xi1>, vector<8x128xi32>
    %cst_8 = arith.constant 0.000000e+00 : f32
    %28 = vector.broadcast %cst_8 : f32 to vector<8x128xf32>
    %cst_9 = arith.constant dense<2147483647> : vector<8xi32>
    %29 = vector.multi_reduction <minsi>, %27, %cst_9 [1] : vector<8x128xi32> to vector<8xi32>
    %30 = vector.shape_cast %29 : vector<8xi32> to vector<8x1xi32>
    %c127_i32 = arith.constant 127 : i32
    %31 = vector.broadcast %c127_i32 : i32 to vector<8x1xi32>
    %32 = arith.andi %30, %31 : vector<8x1xi32>
    %33 = vector.broadcast %32 : vector<8x1xi32> to vector<8x128xi32>
    %34 = arith.cmpi eq, %14, %33 : vector<8x128xi32>
    %c2147483647_i32_10 = arith.constant 2147483647 : i32
    %35 = vector.broadcast %c2147483647_i32_10 : i32 to vector<8x1xi32>
    %36 = arith.cmpi ne, %30, %35 : vector<8x1xi32>
    %37 = vector.broadcast %36 : vector<8x1xi1> to vector<8x128xi1>
    %38 = arith.andi %34, %37 : vector<8x128xi1>
    %39 = arith.extui %38 : vector<8x128xi1> to vector<8x128xi32>
    %40 = arith.sitofp %39 : vector<8x128xi32> to vector<8x128xf32>
    %41 = arith.addf %28, %40 : vector<8x128xf32>
    %c2147483647_i32_11 = arith.constant 2147483647 : i32
    %42 = vector.broadcast %c2147483647_i32_11 : i32 to vector<8x128xi32>
    %43 = arith.select %38, %42, %27 : vector<8x128xi1>, vector<8x128xi32>
    %cst_12 = arith.constant dense<2147483647> : vector<8xi32>
    %44 = vector.multi_reduction <minsi>, %43, %cst_12 [1] : vector<8x128xi32> to vector<8xi32>
    %45 = vector.shape_cast %44 : vector<8xi32> to vector<8x1xi32>
    %c127_i32_13 = arith.constant 127 : i32
    %46 = vector.broadcast %c127_i32_13 : i32 to vector<8x1xi32>
    %47 = arith.andi %45, %46 : vector<8x1xi32>
    %48 = vector.broadcast %47 : vector<8x1xi32> to vector<8x128xi32>
    %49 = arith.cmpi eq, %14, %48 : vector<8x128xi32>
    %c2147483647_i32_14 = arith.constant 2147483647 : i32
    %50 = vector.broadcast %c2147483647_i32_14 : i32 to vector<8x1xi32>
    %51 = arith.cmpi ne, %45, %50 : vector<8x1xi32>
    %52 = vector.broadcast %51 : vector<8x1xi1> to vector<8x128xi1>
    %53 = arith.andi %49, %52 : vector<8x128xi1>
    %54 = arith.extui %53 : vector<8x128xi1> to vector<8x128xi32>
    %55 = arith.sitofp %54 : vector<8x128xi32> to vector<8x128xf32>
    %56 = arith.addf %41, %55 : vector<8x128xf32>
    %c2147483647_i32_15 = arith.constant 2147483647 : i32
    %57 = vector.broadcast %c2147483647_i32_15 : i32 to vector<8x128xi32>
    %58 = arith.select %53, %57, %43 : vector<8x128xi1>, vector<8x128xi32>
    %cst_16 = arith.constant dense<2147483647> : vector<8xi32>
    %59 = vector.multi_reduction <minsi>, %58, %cst_16 [1] : vector<8x128xi32> to vector<8xi32>
    %60 = vector.shape_cast %59 : vector<8xi32> to vector<8x1xi32>
    %c127_i32_17 = arith.constant 127 : i32
    %61 = vector.broadcast %c127_i32_17 : i32 to vector<8x1xi32>
    %62 = arith.andi %60, %61 : vector<8x1xi32>
    %63 = vector.broadcast %62 : vector<8x1xi32> to vector<8x128xi32>
    %64 = arith.cmpi eq, %14, %63 : vector<8x128xi32>
    %c2147483647_i32_18 = arith.constant 2147483647 : i32
    %65 = vector.broadcast %c2147483647_i32_18 : i32 to vector<8x1xi32>
    %66 = arith.cmpi ne, %60, %65 : vector<8x1xi32>
    %67 = vector.broadcast %66 : vector<8x1xi1> to vector<8x128xi1>
    %68 = arith.andi %64, %67 : vector<8x128xi1>
    %69 = arith.extui %68 : vector<8x128xi1> to vector<8x128xi32>
    %70 = arith.sitofp %69 : vector<8x128xi32> to vector<8x128xf32>
    %71 = arith.addf %56, %70 : vector<8x128xf32>
    %c0_19 = arith.constant 0 : index
    %c512 = arith.constant 512 : index
    %72 = vector.load %arg7[%c0_19, %c512] : memref<8x640xf32, #tpu.memory_space<vmem>>, vector<8x128xf32>
    tpu.vector_store %arg7[%c0_19, %c512], %71 {strides = array<i32>} : memref<8x640xf32, #tpu.memory_space<vmem>>, vector<8x128xf32>,
    %c0_20 = arith.constant 0 : index
    %c0_21 = arith.constant 0 : index
    %73 = vector.load %arg3[%c0_20, %c0_21] : memref<32x384xf32, #tpu.memory_space<vmem>>, vector<32x384xf32>
    %cst_22 = arith.constant dense<0.000000e+00> : vector<8x384xf32>
    %74 = tpu.matmul %0, %73, %cst_22 {dimension_numbers = #tpu.dot_dimension_numbers<[1], [0], [0], [1], [0, 0, 1, 1], [], []>} : vector<8x32xf32>, vector<32x384xf32>, vector<8x384xf32> -> vector<8x384xf32>
    %c0_23 = arith.constant 0 : index
    %c0_24 = arith.constant 0 : index
    %75 = vector.load %arg4[%c0_23, %c0_24] : memref<1x384xf32, #tpu.memory_space<vmem>>, vector<1x384xf32>
    %76 = vector.broadcast %75 : vector<1x384xf32> to vector<8x384xf32>
    %77 = arith.addf %74, %76 : vector<8x384xf32>
    %78 = tpu.iota {dimensions = array<i32: 1>} : vector<8x128xi32>
    %79 = vector.extract_strided_slice %77 {offsets = [0, 0], sizes = [8, 128], strides = [1, 1]} : vector<8x384xf32> to vector<8x128xf32>
    %c10_i32 = arith.constant 10 : i32
    %80 = vector.broadcast %c10_i32 : i32 to vector<8x128xi32>
    %81 = arith.cmpi slt, %78, %80 : vector<8x128xi32>
    %cst_25 = arith.constant -1.000000e+30 : f32
    %82 = vector.broadcast %cst_25 : f32 to vector<8x128xf32>
    %83 = arith.select %81, %79, %82 : vector<8x128xi1>, vector<8x128xf32>
    %cst_26 = arith.constant dense<0xFF800000> : vector<8xf32>
    %84 = vector.multi_reduction <maximumf>, %83, %cst_26 [1] : vector<8x128xf32> to vector<8xf32>
    %85 = vector.shape_cast %84 : vector<8xf32> to vector<8x1xf32>
    %86 = vector.broadcast %85 : vector<8x1xf32> to vector<8x128xf32>
    %87 = arith.subf %83, %86 : vector<8x128xf32>
    %88 = math.exp %87 : vector<8x128xf32>
    %cst_27 = arith.constant dense<0.000000e+00> : vector<8xf32>
    %89 = vector.multi_reduction <add>, %88, %cst_27 [1] : vector<8x128xf32> to vector<8xf32>
    %90 = vector.shape_cast %89 : vector<8xf32> to vector<8x1xf32>
    %91 = math.log %90 : vector<8x1xf32>
    %92 = arith.addf %91, %85 : vector<8x1xf32>
    %93 = vector.broadcast %92 : vector<8x1xf32> to vector<8x128xf32>
    %94 = arith.subf %79, %93 : vector<8x128xf32>
    %c0_28 = arith.constant 0 : index
    %c256 = arith.constant 256 : index
    %95 = vector.load %arg7[%c0_28, %c256] : memref<8x640xf32, #tpu.memory_space<vmem>>, vector<8x128xf32>
    tpu.vector_store %arg7[%c0_28, %c256], %94 {strides = array<i32>} : memref<8x640xf32, #tpu.memory_space<vmem>>, vector<8x128xf32>,
    %96 = vector.extract_strided_slice %77 {offsets = [0, 128], sizes = [8, 128], strides = [1, 1]} : vector<8x384xf32> to vector<8x128xf32>
    %cst_29 = arith.constant 1.000000e-01 : f32
    %97 = vector.broadcast %cst_29 : f32 to vector<8x128xf32>
    %98 = arith.mulf %96, %97 : vector<8x128xf32>
    %99 = math.tanh %98 : vector<8x128xf32>
    %cst_30 = arith.constant 1.000000e+01 : f32
    %100 = vector.broadcast %cst_30 : f32 to vector<8x128xf32>
    %101 = arith.mulf %99, %100 : vector<8x128xf32>
    %c0_31 = arith.constant 0 : index
    %c128 = arith.constant 128 : index
    %102 = vector.load %arg7[%c0_31, %c128] : memref<8x640xf32, #tpu.memory_space<vmem>>, vector<8x128xf32>
    tpu.vector_store %arg7[%c0_31, %c128], %101 {strides = array<i32>} : memref<8x640xf32, #tpu.memory_space<vmem>>, vector<8x128xf32>,
    %103 = vector.extract_strided_slice %77 {offsets = [0, 256], sizes = [8, 128], strides = [1, 1]} : vector<8x384xf32> to vector<8x128xf32>
    %cst_32 = arith.constant 1.000000e-01 : f32
    %104 = vector.broadcast %cst_32 : f32 to vector<8x128xf32>
    %105 = arith.mulf %103, %104 : vector<8x128xf32>
    %106 = math.tanh %105 : vector<8x128xf32>
    %cst_33 = arith.constant 1.000000e+01 : f32
    %107 = vector.broadcast %cst_33 : f32 to vector<8x128xf32>
    %108 = arith.mulf %106, %107 : vector<8x128xf32>
    %109 = arith.mulf %10, %71 : vector<8x128xf32>
    %cst_34 = arith.constant dense<0.000000e+00> : vector<8xf32>
    %110 = vector.multi_reduction <add>, %109, %cst_34 [1] : vector<8x128xf32> to vector<8xf32>
    %111 = vector.shape_cast %110 : vector<8xf32> to vector<8x1xf32>
    %c0_35 = arith.constant 0 : index
    %c0_36 = arith.constant 0 : index
    %112 = vector.load %arg5[%c0_35, %c0_36] : memref<128x128xf32, #tpu.memory_space<vmem>>, vector<128x128xf32>
    %cst_37 = arith.constant dense<0.000000e+00> : vector<8x128xf32>
    %113 = tpu.matmul %109, %112, %cst_37 {dimension_numbers = #tpu.dot_dimension_numbers<[1], [0], [0], [1], [0, 0, 1, 1], [], []>} : vector<8x128xf32>, vector<128x128xf32>, vector<8x128xf32> -> vector<8x128xf32>
    %114 = arith.mulf %108, %113 : vector<8x128xf32>
    %c0_38 = arith.constant 0 : index
    %c0_39 = arith.constant 0 : index
    %115 = vector.load %arg6[%c0_38, %c0_39] : memref<128x128xf32, #tpu.memory_space<vmem>>, vector<128x128xf32>
    %cst_40 = arith.constant dense<0.000000e+00> : vector<8x128xf32>
    %116 = tpu.matmul %114, %115, %cst_40 {dimension_numbers = #tpu.dot_dimension_numbers<[1], [0], [0], [1], [0, 0, 1, 1], [], []>} : vector<8x128xf32>, vector<128x128xf32>, vector<8x128xf32> -> vector<8x128xf32>
    %117 = tpu.reciprocal %111 {approx = true} : vector<8x1xf32> -> vector<8x1xf32>
    %118 = arith.mulf %111, %117 : vector<8x1xf32>
    %cst_41 = arith.constant 2.000000e+00 : f32
    %119 = vector.broadcast %cst_41 : f32 to vector<8x1xf32>
    %120 = arith.subf %119, %118 : vector<8x1xf32>
    %121 = arith.mulf %117, %120 : vector<8x1xf32>
    %122 = vector.broadcast %121 : vector<8x1xf32> to vector<8x128xf32>
    %123 = arith.mulf %116, %122 : vector<8x128xf32>
    %c0_42 = arith.constant 0 : index
    %c0_43 = arith.constant 0 : index
    %124 = vector.load %arg7[%c0_42, %c0_43] : memref<8x640xf32, #tpu.memory_space<vmem>>, vector<8x128xf32>
    tpu.vector_store %arg7[%c0_42, %c0_43], %123 {strides = array<i32>} : memref<8x640xf32, #tpu.memory_space<vmem>>, vector<8x128xf32>,
    return
  }
  func.func @transform_0(%arg0: i32) -> (i32, i32) {
    %c0_i32 = arith.constant 0 : i32
    %c0_i32_0 = arith.constant 0 : i32
    return %arg0, %c0_i32 : i32, i32
  }
  func.func @transform_1(%arg0: i32) -> (i32, i32) {
    %c0_i32 = arith.constant 0 : i32
    %c0_i32_0 = arith.constant 0 : i32
    %c0_i32_1 = arith.constant 0 : i32
    return %c0_i32, %c0_i32_0 : i32, i32
  }
  func.func @transform_2(%arg0: i32) -> (i32, i32) {
    %c0_i32 = arith.constant 0 : i32
    %c0_i32_0 = arith.constant 0 : i32
    %c0_i32_1 = arith.constant 0 : i32
    return %c0_i32, %c0_i32_0 : i32, i32
  }
  func.func @transform_3(%arg0: i32) -> (i32, i32) {
    %c0_i32 = arith.constant 0 : i32
    %c0_i32_0 = arith.constant 0 : i32
    %c0_i32_1 = arith.constant 0 : i32
    return %c0_i32, %c0_i32_0 : i32, i32
  }
  func.func @transform_4(%arg0: i32) -> (i32, i32) {
    %c0_i32 = arith.constant 0 : i32
    %c0_i32_0 = arith.constant 0 : i32
    %c0_i32_1 = arith.constant 0 : i32
    return %c0_i32, %c0_i32_0 : i32, i32
  }
  func.func @transform_5(%arg0: i32) -> (i32, i32) {
    %c0_i32 = arith.constant 0 : i32
    %c0_i32_0 = arith.constant 0 : i32
    %c0_i32_1 = arith.constant 0 : i32
    return %c0_i32, %c0_i32_0 : i32, i32
  }
  func.func @transform_6(%arg0: i32) -> (i32, i32) {
    %c0_i32 = arith.constant 0 : i32
    %c0_i32_0 = arith.constant 0 : i32
    return %arg0, %c0_i32 : i32, i32
  }
}

module attributes {stable_mosaic.version = 11 : i64} {
  func.func @ensemble_kernel(%arg0: i32, %arg1: memref<8x32xf32, #tpu.memory_space<vmem>>, %arg2: memref<32x128xf32, #tpu.memory_space<vmem>>, %arg3: memref<32x384xf32, #tpu.memory_space<vmem>>, %arg4: memref<1x384xf32, #tpu.memory_space<vmem>>, %arg5: memref<128x128xf32, #tpu.memory_space<vmem>>, %arg6: memref<128x128xf32, #tpu.memory_space<vmem>>, %arg7: memref<8x640xf32, #tpu.memory_space<vmem>>) attributes {dimension_semantics = [#tpu.dimension_semantics<parallel>], iteration_bounds = array<i64: 1>, scalar_prefetch = 0 : i64, scratch_operands = 0 : i64, tpu.core_type = #tpu.core_type<tc>, window_params = [{transform_indices = @transform_0, window_bounds = array<i64: 8, 32>}, {pipeline_mode = #tpu.pipeline_mode<synchronous>, transform_indices = @transform_1, window_bounds = array<i64: 32, 128>}, {pipeline_mode = #tpu.pipeline_mode<synchronous>, transform_indices = @transform_2, window_bounds = array<i64: 32, 384>}, {pipeline_mode = #tpu.pipeline_mode<synchronous>, transform_indices = @transform_3, window_bounds = array<i64: 1, 384>}, {pipeline_mode = #tpu.pipeline_mode<synchronous>, transform_indices = @transform_4, window_bounds = array<i64: 128, 128>}, {pipeline_mode = #tpu.pipeline_mode<synchronous>, transform_indices = @transform_5, window_bounds = array<i64: 128, 128>}, {transform_indices = @transform_6, window_bounds = array<i64: 8, 640>}]} {
    %c0 = arith.constant 0 : index
    %c0_0 = arith.constant 0 : index
    %0 = vector.load %arg1[%c0, %c0_0] : memref<8x32xf32, #tpu.memory_space<vmem>>, vector<8x32xf32>
    %c0_1 = arith.constant 0 : index
    %c0_2 = arith.constant 0 : index
    %1 = vector.load %arg2[%c0_1, %c0_2] : memref<32x128xf32, #tpu.memory_space<vmem>>, vector<32x128xf32>
    %cst = arith.constant dense<0.000000e+00> : vector<8x128xf32>
    %2 = tpu.matmul %0, %1, %cst {dimension_numbers = #tpu.dot_dimension_numbers<[1], [0], [0], [1], [0, 0, 1, 1], [], []>} : vector<8x32xf32>, vector<32x128xf32>, vector<8x128xf32> -> vector<8x128xf32>
    %3 = arith.mulf %0, %0 : vector<8x32xf32>
    %cst_3 = arith.constant dense<0.000000e+00> : vector<8xf32>
    %4 = vector.multi_reduction <add>, %3, %cst_3 [1] : vector<8x32xf32> to vector<8xf32>
    %5 = vector.shape_cast %4 : vector<8xf32> to vector<8x1xf32>
    %cst_4 = arith.constant 1.000000e-24 : f32
    %6 = vector.broadcast %cst_4 : f32 to vector<8x1xf32>
    %7 = arith.maximumf %5, %6 : vector<8x1xf32>
    %8 = math.rsqrt %7 : vector<8x1xf32>
    %9 = vector.broadcast %8 : vector<8x1xf32> to vector<8x128xf32>
    %10 = arith.mulf %2, %9 : vector<8x128xf32>
    %cst_5 = arith.constant 1.000000e+00 : f32
    %11 = vector.broadcast %cst_5 : f32 to vector<8x128xf32>
    %12 = arith.subf %11, %10 : vector<8x128xf32>
    %c0_6 = arith.constant 0 : index
    %c384 = arith.constant 384 : index
    %13 = vector.load %arg7[%c0_6, %c384] : memref<8x640xf32, #tpu.memory_space<vmem>>, vector<8x128xf32>
    tpu.vector_store %arg7[%c0_6, %c384], %12 {strides = array<i32>} : memref<8x640xf32, #tpu.memory_space<vmem>>, vector<8x128xf32>,
    %14 = tpu.iota {dimensions = array<i32: 1>} : vector<8x128xi32>
    %15 = tpu.bitcast %12 : vector<8x128xf32> -> vector<8x128xi32>
    %c0_i32 = arith.constant 0 : i32
    %16 = vector.broadcast %c0_i32 : i32 to vector<8x128xi32>
    %17 = arith.cmpi slt, %15, %16 : vector<8x128xi32>
    %c2147483647_i32 = arith.constant 2147483647 : i32
    %18 = vector.broadcast %c2147483647_i32 : i32 to vector<8x128xi32>
    %19 = arith.xori %15, %18 : vector<8x128xi32>
    %20 = arith.select %17, %19, %15 : vector<8x128xi1>, vector<8x128xi32>
    %c8_i32 = arith.constant 8 : i32
    %21 = vector.broadcast %c8_i32 : i32 to vector<8x128xi32>
    %22 = arith.cmpi slt, %14, %21 : vector<8x128xi32>
    %c-128_i32 = arith.constant -128 : i32
    %23 = vector.broadcast %c-128_i32 : i32 to vector<8x128xi32>
    %24 = arith.andi %20, %23 : vector<8x128xi32>
    %25 = arith.ori %24, %14 : vector<8x128xi32>
    %c2147483647_i32_7 = arith.constant 2147483647 : i32
    %26 = vector.broadcast %c2147483647_i32_7 : i32 to vector<8x128xi32>
    %27 = arith.select %22, %25, %26 : vector<8x128xi1>, vector<8x128xi32>
    %cst_8 = arith.constant 0.000000e+00 : f32
    %28 = vector.broadcast %cst_8 : f32 to vector<8x128xf32>
    %cst_9 = arith.constant dense<2147483647> : vector<8xi32>
    %29 = vector.multi_reduction <minsi>, %27, %cst_9 [1] : vector<8x128xi32> to vector<8xi32>
    %30 = vector.shape_cast %29 : vector<8xi32> to vector<8x1xi32>
    %c127_i32 = arith.constant 127 : i32
    %31 = vector.broadcast %c127_i32 : i32 to vector<8x1xi32>
    %32 = arith.andi %30, %31 : vector<8x1xi32>
    %33 = vector.broadcast %32 : vector<8x1xi32> to vector<8x128xi32>
    %34 = arith.cmpi eq, %14, %33 : vector<8x128xi32>
    %c2147483647_i32_10 = arith.constant 2147483647 : i32
    %35 = vector.broadcast %c2147483647_i32_10 : i32 to vector<8x1xi32>
    %36 = arith.cmpi ne, %30, %35 : vector<8x1xi32>
    %37 = vector.broadcast %36 : vector<8x1xi1> to vector<8x128xi1>
    %38 = arith.andi %34, %37 : vector<8x128xi1>
    %39 = arith.extui %38 : vector<8x128xi1> to vector<8x128xi32>
    %40 = arith.sitofp %39 : vector<8x128xi32> to vector<8x128xf32>
    %41 = arith.addf %28, %40 : vector<8x128xf32>
    %c2147483647_i32_11 = arith.constant 2147483647 : i32
    %42 = vector.broadcast %c2147483647_i32_11 : i32 to vector<8x128xi32>
    %43 = arith.select %38, %42, %27 : vector<8x128xi1>, vector<8x128xi32>
    %cst_12 = arith.constant dense<2147483647> : vector<8xi32>
    %44 = vector.multi_reduction <minsi>, %43, %cst_12 [1] : vector<8x128xi32> to vector<8xi32>
    %45 = vector.shape_cast %44 : vector<8xi32> to vector<8x1xi32>
    %c127_i32_13 = arith.constant 127 : i32
    %46 = vector.broadcast %c127_i32_13 : i32 to vector<8x1xi32>
    %47 = arith.andi %45, %46 : vector<8x1xi32>
    %48 = vector.broadcast %47 : vector<8x1xi32> to vector<8x128xi32>
    %49 = arith.cmpi eq, %14, %48 : vector<8x128xi32>
    %c2147483647_i32_14 = arith.constant 2147483647 : i32
    %50 = vector.broadcast %c2147483647_i32_14 : i32 to vector<8x1xi32>
    %51 = arith.cmpi ne, %45, %50 : vector<8x1xi32>
    %52 = vector.broadcast %51 : vector<8x1xi1> to vector<8x128xi1>
    %53 = arith.andi %49, %52 : vector<8x128xi1>
    %54 = arith.extui %53 : vector<8x128xi1> to vector<8x128xi32>
    %55 = arith.sitofp %54 : vector<8x128xi32> to vector<8x128xf32>
    %56 = arith.addf %41, %55 : vector<8x128xf32>
    %c2147483647_i32_15 = arith.constant 2147483647 : i32
    %57 = vector.broadcast %c2147483647_i32_15 : i32 to vector<8x128xi32>
    %58 = arith.select %53, %57, %43 : vector<8x128xi1>, vector<8x128xi32>
    %cst_16 = arith.constant dense<2147483647> : vector<8xi32>
    %59 = vector.multi_reduction <minsi>, %58, %cst_16 [1] : vector<8x128xi32> to vector<8xi32>
    %60 = vector.shape_cast %59 : vector<8xi32> to vector<8x1xi32>
    %c127_i32_17 = arith.constant 127 : i32
    %61 = vector.broadcast %c127_i32_17 : i32 to vector<8x1xi32>
    %62 = arith.andi %60, %61 : vector<8x1xi32>
    %63 = vector.broadcast %62 : vector<8x1xi32> to vector<8x128xi32>
    %64 = arith.cmpi eq, %14, %63 : vector<8x128xi32>
    %c2147483647_i32_18 = arith.constant 2147483647 : i32
    %65 = vector.broadcast %c2147483647_i32_18 : i32 to vector<8x1xi32>
    %66 = arith.cmpi ne, %60, %65 : vector<8x1xi32>
    %67 = vector.broadcast %66 : vector<8x1xi1> to vector<8x128xi1>
    %68 = arith.andi %64, %67 : vector<8x128xi1>
    %69 = arith.extui %68 : vector<8x128xi1> to vector<8x128xi32>
    %70 = arith.sitofp %69 : vector<8x128xi32> to vector<8x128xf32>
    %71 = arith.addf %56, %70 : vector<8x128xf32>
    %c0_19 = arith.constant 0 : index
    %c512 = arith.constant 512 : index
    %72 = vector.load %arg7[%c0_19, %c512] : memref<8x640xf32, #tpu.memory_space<vmem>>, vector<8x128xf32>
    tpu.vector_store %arg7[%c0_19, %c512], %71 {strides = array<i32>} : memref<8x640xf32, #tpu.memory_space<vmem>>, vector<8x128xf32>,
    %c0_20 = arith.constant 0 : index
    %c0_21 = arith.constant 0 : index
    %73 = vector.load %arg3[%c0_20, %c0_21] : memref<32x384xf32, #tpu.memory_space<vmem>>, vector<32x384xf32>
    %cst_22 = arith.constant dense<0.000000e+00> : vector<8x384xf32>
    %74 = tpu.matmul %0, %73, %cst_22 {dimension_numbers = #tpu.dot_dimension_numbers<[1], [0], [0], [1], [0, 0, 1, 1], [], []>} : vector<8x32xf32>, vector<32x384xf32>, vector<8x384xf32> -> vector<8x384xf32>
    %c0_23 = arith.constant 0 : index
    %c0_24 = arith.constant 0 : index
    %75 = vector.load %arg4[%c0_23, %c0_24] : memref<1x384xf32, #tpu.memory_space<vmem>>, vector<1x384xf32>
    %76 = vector.broadcast %75 : vector<1x384xf32> to vector<8x384xf32>
    %77 = arith.addf %74, %76 : vector<8x384xf32>
    %78 = tpu.iota {dimensions = array<i32: 1>} : vector<8x128xi32>
    %79 = vector.extract_strided_slice %77 {offsets = [0, 0], sizes = [8, 128], strides = [1, 1]} : vector<8x384xf32> to vector<8x128xf32>
    %c10_i32 = arith.constant 10 : i32
    %80 = vector.broadcast %c10_i32 : i32 to vector<8x128xi32>
    %81 = arith.cmpi slt, %78, %80 : vector<8x128xi32>
    %cst_25 = arith.constant -1.000000e+30 : f32
    %82 = vector.broadcast %cst_25 : f32 to vector<8x128xf32>
    %83 = arith.select %81, %79, %82 : vector<8x128xi1>, vector<8x128xf32>
    %cst_26 = arith.constant dense<0xFF800000> : vector<8xf32>
    %84 = vector.multi_reduction <maximumf>, %83, %cst_26 [1] : vector<8x128xf32> to vector<8xf32>
    %85 = vector.shape_cast %84 : vector<8xf32> to vector<8x1xf32>
    %86 = vector.broadcast %85 : vector<8x1xf32> to vector<8x128xf32>
    %87 = arith.subf %83, %86 : vector<8x128xf32>
    %88 = math.exp %87 : vector<8x128xf32>
    %cst_27 = arith.constant dense<0.000000e+00> : vector<8xf32>
    %89 = vector.multi_reduction <add>, %88, %cst_27 [1] : vector<8x128xf32> to vector<8xf32>
    %90 = vector.shape_cast %89 : vector<8xf32> to vector<8x1xf32>
    %91 = math.log %90 : vector<8x1xf32>
    %92 = arith.addf %91, %85 : vector<8x1xf32>
    %93 = vector.broadcast %92 : vector<8x1xf32> to vector<8x128xf32>
    %94 = arith.subf %79, %93 : vector<8x128xf32>
    %c0_28 = arith.constant 0 : index
    %c256 = arith.constant 256 : index
    %95 = vector.load %arg7[%c0_28, %c256] : memref<8x640xf32, #tpu.memory_space<vmem>>, vector<8x128xf32>
    tpu.vector_store %arg7[%c0_28, %c256], %94 {strides = array<i32>} : memref<8x640xf32, #tpu.memory_space<vmem>>, vector<8x128xf32>,
    %96 = vector.extract_strided_slice %77 {offsets = [0, 128], sizes = [8, 128], strides = [1, 1]} : vector<8x384xf32> to vector<8x128xf32>
    %cst_29 = arith.constant 1.000000e-01 : f32
    %97 = vector.broadcast %cst_29 : f32 to vector<8x128xf32>
    %98 = arith.mulf %96, %97 : vector<8x128xf32>
    %99 = math.tanh %98 : vector<8x128xf32>
    %cst_30 = arith.constant 1.000000e+01 : f32
    %100 = vector.broadcast %cst_30 : f32 to vector<8x128xf32>
    %101 = arith.mulf %99, %100 : vector<8x128xf32>
    %c0_31 = arith.constant 0 : index
    %c128 = arith.constant 128 : index
    %102 = vector.load %arg7[%c0_31, %c128] : memref<8x640xf32, #tpu.memory_space<vmem>>, vector<8x128xf32>
    tpu.vector_store %arg7[%c0_31, %c128], %101 {strides = array<i32>} : memref<8x640xf32, #tpu.memory_space<vmem>>, vector<8x128xf32>,
    %103 = vector.extract_strided_slice %77 {offsets = [0, 256], sizes = [8, 128], strides = [1, 1]} : vector<8x384xf32> to vector<8x128xf32>
    %cst_32 = arith.constant 1.000000e-01 : f32
    %104 = vector.broadcast %cst_32 : f32 to vector<8x128xf32>
    %105 = arith.mulf %103, %104 : vector<8x128xf32>
    %106 = math.tanh %105 : vector<8x128xf32>
    %cst_33 = arith.constant 1.000000e+01 : f32
    %107 = vector.broadcast %cst_33 : f32 to vector<8x128xf32>
    %108 = arith.mulf %106, %107 : vector<8x128xf32>
    %109 = arith.mulf %10, %71 : vector<8x128xf32>
    %cst_34 = arith.constant dense<0.000000e+00> : vector<8xf32>
    %110 = vector.multi_reduction <add>, %109, %cst_34 [1] : vector<8x128xf32> to vector<8xf32>
    %111 = vector.shape_cast %110 : vector<8xf32> to vector<8x1xf32>
    %c0_35 = arith.constant 0 : index
    %c0_36 = arith.constant 0 : index
    %112 = vector.load %arg5[%c0_35, %c0_36] : memref<128x128xf32, #tpu.memory_space<vmem>>, vector<128x128xf32>
    %cst_37 = arith.constant dense<0.000000e+00> : vector<8x128xf32>
    %113 = tpu.matmul %109, %112, %cst_37 {dimension_numbers = #tpu.dot_dimension_numbers<[1], [0], [0], [1], [0, 0, 1, 1], [], []>} : vector<8x128xf32>, vector<128x128xf32>, vector<8x128xf32> -> vector<8x128xf32>
    %114 = arith.mulf %108, %113 : vector<8x128xf32>
    %c0_38 = arith.constant 0 : index
    %c0_39 = arith.constant 0 : index
    %115 = vector.load %arg6[%c0_38, %c0_39] : memref<128x128xf32, #tpu.memory_space<vmem>>, vector<128x128xf32>
    %cst_40 = arith.constant dense<0.000000e+00> : vector<8x128xf32>
    %116 = tpu.matmul %114, %115, %cst_40 {dimension_numbers = #tpu.dot_dimension_numbers<[1], [0], [0], [1], [0, 0, 1, 1], [], []>} : vector<8x128xf32>, vector<128x128xf32>, vector<8x128xf32> -> vector<8x128xf32>
    %117 = tpu.reciprocal %111 {approx = true} : vector<8x1xf32> -> vector<8x1xf32>
    %118 = arith.mulf %111, %117 : vector<8x1xf32>
    %cst_41 = arith.constant 2.000000e+00 : f32
    %119 = vector.broadcast %cst_41 : f32 to vector<8x1xf32>
    %120 = arith.subf %119, %118 : vector<8x1xf32>
    %121 = arith.mulf %117, %120 : vector<8x1xf32>
    %122 = vector.broadcast %121 : vector<8x1xf32> to vector<8x128xf32>
    %123 = arith.mulf %116, %122 : vector<8x128xf32>
    %c0_42 = arith.constant 0 : index
    %c0_43 = arith.constant 0 : index
    %124 = vector.load %arg7[%c0_42, %c0_43] : memref<8x640xf32, #tpu.memory_space<vmem>>, vector<8x128xf32>
    tpu.vector_store %arg7[%c0_42, %c0_43], %123 {strides = array<i32>} : memref<8x640xf32, #tpu.memory_space<vmem>>, vector<8x128xf32>,
    return
  }
  func.func @transform_0(%arg0: i32) -> (i32, i32) {
    %c0_i32 = arith.constant 0 : i32
    %c0_i32_0 = arith.constant 0 : i32
    return %arg0, %c0_i32 : i32, i32
  }
  func.func @transform_1(%arg0: i32) -> (i32, i32) {
    %c0_i32 = arith.constant 0 : i32
    %c0_i32_0 = arith.constant 0 : i32
    %c0_i32_1 = arith.constant 0 : i32
    return %c0_i32, %c0_i32_0 : i32, i32
  }
  func.func @transform_2(%arg0: i32) -> (i32, i32) {
    %c0_i32 = arith.constant 0 : i32
    %c0_i32_0 = arith.constant 0 : i32
    %c0_i32_1 = arith.constant 0 : i32
    return %c0_i32, %c0_i32_0 : i32, i32
  }
  func.func @transform_3(%arg0: i32) -> (i32, i32) {
    %c0_i32 = arith.constant 0 : i32
    %c0_i32_0 = arith.constant 0 : i32
    %c0_i32_1 = arith.constant 0 : i32
    return %c0_i32, %c0_i32_0 : i32, i32
  }
  func.func @transform_4(%arg0: i32) -> (i32, i32) {
    %c0_i32 = arith.constant 0 : i32
    %c0_i32_0 = arith.constant 0 : i32
    %c0_i32_1 = arith.constant 0 : i32
    return %c0_i32, %c0_i32_0 : i32, i32
  }
  func.func @transform_5(%arg0: i32) -> (i32, i32) {
    %c0_i32 = arith.constant 0 : i32
    %c0_i32_0 = arith.constant 0 : i32
    %c0_i32_1 = arith.constant 0 : i32
    return %c0_i32, %c0_i32_0 : i32, i32
  }
  func.func @transform_6(%arg0: i32) -> (i32, i32) {
    %c0_i32 = arith.constant 0 : i32
    %c0_i32_0 = arith.constant 0 : i32
    return %arg0, %c0_i32 : i32, i32
  }
}

</mosaic_0001>

<llo_original>
// kernel: tpu_custom_call.1
$region0: #{tpu_custom_call.1}
  #allocation0 [shape = 'u32[]', space=smem, size = 0x4, offset = 0x4, fixed_abs, tag = 'smem constant byte address 0x4 - core index']
  #allocation1 [shape = 'u32[144,128]{1,0:T(1,128)}', space=vmem, size = 0x12000, scoped, tag = 'internal scratch']
  %s0 = inlined_call_operand.hbm [shape: f32[8,32], index: 0, kind: input, shape index: {}]
  %s1 = inlined_call_operand.hbm [shape: f32[32,128], index: 1, kind: input, shape index: {}]
  %s2 = inlined_call_operand.hbm [shape: f32[32,384], index: 2, kind: input, shape index: {}]
  %s3 = inlined_call_operand.vmem [shape: f32[1,384], index: 3, kind: input, shape index: {}]
  %s4 = inlined_call_operand.hbm [shape: f32[128,128], index: 4, kind: input, shape index: {}]
  %s5 = inlined_call_operand.hbm [shape: f32[128,128], index: 5, kind: input, shape index: {}]
  %s6 = inlined_call_operand.hbm [shape: f32[8,640], index: 6, kind: output, shape index: {}]
  %s7 = sld [smem:[#allocation0]]
  $region54: #{tpu_custom_call.1} parent=0
    _
  %s9 = ssub.s32 1, %s7
  %s10 = scalar_select 0, %s9, %s7
  $region1: #{tpu_custom_call.1} parent=0
    #allocation2 [shape = 'u8[4096]{0}', space=vmem, size = 0x1000, scoped, tag = 'input window, operand 0, single buffered']
    #allocation3 [shape = 's32[1]{0}', space=sflag, size = 0x4, scoped, tag = 'scoped memory for tpu_custom_call.1']
    #allocation4 [shape = 's32[1]{0}', space=sflag, size = 0x4, scoped, tag = 'scoped memory for tpu_custom_call.1']
    #allocation5 [shape = 'u8[16384]{0}', space=vmem, size = 0x4000, scoped, tag = 'input window, operand 1, single buffered']
    #allocation6 [shape = 's32[1]{0}', space=sflag, size = 0x4, scoped, tag = 'scoped memory for tpu_custom_call.1']
    #allocation7 [shape = 'u8[49152]{0}', space=vmem, size = 0xc000, scoped, tag = 'input window, operand 2, single buffered']
    #allocation8 [shape = 'u8[65536]{0}', space=vmem, size = 0x10000, scoped, tag = 'input window, operand 4, single buffered']
    #allocation9 [shape = 's32[1]{0}', space=sflag, size = 0x4, scoped, tag = 'scoped memory for tpu_custom_call.1']
    #allocation10 [shape = 'u8[65536]{0}', space=vmem, size = 0x10000, scoped, tag = 'input window, operand 5, single buffered']
    #allocation11 [shape = 'u8[20480]{0}', space=vmem, size = 0x5000, scoped, tag = 'output window, operand 0, single buffered']
    %11 = vsyncpa [#allocation3], 0
    %12 = vsyncpa [#allocation6], 0
    %13 = vsyncpa [#allocation9], 0
    %14 = vsyncpa [#allocation4], 0
    // Predicated region
    $region2: #{tpu_custom_call.1} parent=1 // pred_check
      _
    $region3: #{tpu_custom_call.1} parent=1 // pred_check_branch
      %16 = sbr.rel (0) target = $region5
    $region4: #{tpu_custom_call.1} parent=1 // pred_region
      %s18 = ssub.s32 128, 128
      %19 = vsyncadd [#allocation3], %s18
      %s21 = sshll.u32 [#allocation2], 4
      %s22 = int_to_ptr.vmem [resolvable:$true] %s21
      %24 = dma.hbm_to_vmem [thread:$0]  %s0, 128, %s22, [#allocation3]
    $region5: #{tpu_custom_call.1} parent=1 // pred_fallthru
      _
    // Predicated region
    $region6: #{tpu_custom_call.1} parent=1 // pred_check
      _
    $region7: #{tpu_custom_call.1} parent=1 // pred_check_branch
      %26 = sbr.rel (0) target = $region9
    $region8: #{tpu_custom_call.1} parent=1 // pred_region
      %s28 = ssub.s32 512, 512
      %29 = vsyncadd [#allocation6], %s28
      %s30 = sshll.u32 [#allocation5], 4
      %s31 = int_to_ptr.vmem [resolvable:$true] %s30
      %36 = dma.hbm_to_vmem [thread:$0]  %s1, 512, %s31, [#allocation6], 128, 128, 8
    $region9: #{tpu_custom_call.1} parent=1 // pred_fallthru
      _
    // Predicated region
    $region10: #{tpu_custom_call.1} parent=1 // pred_check
      _
    $region11: #{tpu_custom_call.1} parent=1 // pred_check_branch
      %38 = sbr.rel (0) target = $region13
    $region12: #{tpu_custom_call.1} parent=1 // pred_region
      %s40 = ssub.s32 1536, 1536
      %41 = vsyncadd [#allocation6], %s40
      %s42 = sshll.u32 [#allocation7], 4
      %s43 = int_to_ptr.vmem [resolvable:$true] %s42
      %48 = dma.hbm_to_vmem [thread:$0]  %s2, 1536, %s43, [#allocation6], 384, 384, 24
    $region13: #{tpu_custom_call.1} parent=1 // pred_fallthru
      _
    // Predicated region
    $region14: #{tpu_custom_call.1} parent=1 // pred_check
      _
    $region15: #{tpu_custom_call.1} parent=1 // pred_check_branch
      %50 = sbr.rel (0) target = $region17
    $region16: #{tpu_custom_call.1} parent=1 // pred_region
      _
    $region17: #{tpu_custom_call.1} parent=1 // pred_fallthru
      _
    // Predicated region
    $region18: #{tpu_custom_call.1} parent=1 // pred_check
      _
    $region19: #{tpu_custom_call.1} parent=1 // pred_check_branch
      %52 = sbr.rel (0) target = $region21
    $region20: #{tpu_custom_call.1} parent=1 // pred_region
      %s54 = ssub.s32 2048, 2048
      %55 = vsyncadd [#allocation9], %s54
      %s56 = sshll.u32 [#allocation8], 4
      %s57 = int_to_ptr.vmem [resolvable:$true] %s56
      %62 = dma.hbm_to_vmem [thread:$0]  %s4, 2048, %s57, [#allocation9], 128, 128, 8
    $region21: #{tpu_custom_call.1} parent=1 // pred_fallthru
      _
    // Predicated region
    $region22: #{tpu_custom_call.1} parent=1 // pred_check
      _
    $region23: #{tpu_custom_call.1} parent=1 // pred_check_branch
      %64 = sbr.rel (0) target = $region25
    $region24: #{tpu_custom_call.1} parent=1 // pred_region
      %s66 = ssub.s32 2048, 2048
      %67 = vsyncadd [#allocation9], %s66
      %s68 = sshll.u32 [#allocation10], 4
      %s69 = int_to_ptr.vmem [resolvable:$true] %s68
      %74 = dma.hbm_to_vmem [thread:$0]  %s5, 2048, %s69, [#allocation9], 128, 128, 8
    $region25: #{tpu_custom_call.1} parent=1 // pred_fallthru
      _
    // Predicated region
    $region26: #{tpu_custom_call.1} parent=1 // pred_check
      _
    $region27: #{tpu_custom_call.1} parent=1 // pred_check_branch
      %76 = sbr.rel (0) target = $region29
    $region28: #{tpu_custom_call.1} parent=1 // pred_region
      %77 = dma.done [#allocation3], 128
    $region29: #{tpu_custom_call.1} parent=1 // pred_fallthru
      _
    // Predicated region
    $region30: #{tpu_custom_call.1} parent=1 // pred_check
      _
    $region31: #{tpu_custom_call.1} parent=1 // pred_check_branch
      %79 = sbr.rel (0) target = $region33
    $region32: #{tpu_custom_call.1} parent=1 // pred_region
      %80 = dma.done [#allocation6], 512
    $region33: #{tpu_custom_call.1} parent=1 // pred_fallthru
      _
    // Predicated region
    $region34: #{tpu_custom_call.1} parent=1 // pred_check
      _
    $region35: #{tpu_custom_call.1} parent=1 // pred_check_branch
      %82 = sbr.rel (0) target = $region37
    $region36: #{tpu_custom_call.1} parent=1 // pred_region
      %83 = dma.done [#allocation6], 1536
    $region37: #{tpu_custom_call.1} parent=1 // pred_fallthru
      _
    // Predicated region
    $region38: #{tpu_custom_call.1} parent=1 // pred_check
      _
    $region39: #{tpu_custom_call.1} parent=1 // pred_check_branch
      %85 = sbr.rel (0) target = $region41
    $region40: #{tpu_custom_call.1} parent=1 // pred_region
      %86 = dma.done [#allocation9], 2048
    $region41: #{tpu_custom_call.1} parent=1 // pred_fallthru
      _
    // Predicated region
    $region42: #{tpu_custom_call.1} parent=1 // pred_check
      _
    $region43: #{tpu_custom_call.1} parent=1 // pred_check_branch
      %88 = sbr.rel (0) target = $region45
    $region44: #{tpu_custom_call.1} parent=1 // pred_region
      %89 = dma.done [#allocation9], 2048
    $region45: #{tpu_custom_call.1} parent=1 // pred_fallthru
      _
    %v90 = vld [vmem:[#allocation2] sm:$0xff]
    %v91 = vld [vmem:[#allocation5] sm:$0xff]
    %v92 = vld [vmem:[#allocation5 + $0x8] sm:$0xff]
    %v93 = vld [vmem:[#allocation5 + $0x10] sm:$0xff]
    %v94 = vld [vmem:[#allocation5 + $0x18] sm:$0xff]
    %vm95 = vcmask 261120
    %v97 = vsel %vm95, %v90, 0
    %99 = vmatprep.subr.mxu0 0.0
    %100 = vmatpush1.msra.mxu0 %v91
    %101 = vmatprep.subr.mxu0 0.0
    %102 = vmatpush1.msra.mxu0 %v92
    %103 = vmatprep.subr.mxu0 0.0
    %104 = vmatpush1.msra.mxu0 %v93
    %105 = vmatprep.subr.mxu0 0.0
    %106 = vmatpush1.msra.mxu0 %v94
    %107 = vmatprep.subr.mxu0 0.0
    %108 = vmatpush1.msra.mxu0 0.0
    %109 = vmatprep.subr.mxu0 0.0
    %110 = vmatpush1.msra.mxu0 0.0
    %111 = vmatprep.subr.mxu0 0.0
    %112 = vmatpush1.msra.mxu0 0.0
    %113 = vmatprep.subr.mxu0 0.0
    %114 = vmatpush1.msra.mxu0 0.0
    %115 = vmatprep.subr.mxu0 0.0
    %116 = vmatpush1.msra.mxu0 0.0
    %117 = vmatprep.subr.mxu0 0.0
    %118 = vmatpush1.msra.mxu0 0.0
    %119 = vmatprep.subr.mxu0 0.0
    %120 = vmatpush1.msra.mxu0 0.0
    %121 = vmatprep.subr.mxu0 0.0
    %122 = vmatpush1.msra.mxu0 0.0
    %123 = vmatprep.subr.mxu0 0.0
    %124 = vmatpush1.msra.mxu0 0.0
    %125 = vmatprep.subr.mxu0 0.0
    %126 = vmatpush1.msra.mxu0 0.0
    %127 = vmatprep.subr.mxu0 0.0
    %128 = vmatpush1.msra.mxu0 0.0
    %129 = vmatprep.subr.mxu0 0.0
    %130 = vmatpush1.msra.mxu0 0.0
    %131 = vmatprep.subr.mxu0 0.0
    %132 = vmatpush1.msra.mxu0 0.0
    %133 = vmatprep.subr.mxu0 0.0
    %134 = vmatpush1.msra.mxu0 0.0
    %135 = vmatprep.subr.mxu0 0.0
    %136 = vmatpush1.msra.mxu0 0.0
    %137 = vmatprep.subr.mxu0 0.0
    %138 = vmatpush1.msra.mxu0 0.0
    %139 = vmatprep.subr.mxu0 0.0
    %140 = vmatpush1.msra.mxu0 0.0
    %141 = vmatprep.subr.mxu0 0.0
    %142 = vmatpush1.msra.mxu0 0.0
    %143 = vmatprep.subr.mxu0 0.0
    %144 = vmatpush1.msra.mxu0 0.0
    %145 = vmatprep.subr.mxu0 0.0
    %146 = vmatpush1.msra.mxu0 0.0
    %147 = vmatprep.subr.mxu0 0.0
    %148 = vmatpush1.msra.mxu0 0.0
    %149 = vmatprep.subr.mxu0 0.0
    %150 = vmatpush1.msra.mxu0 0.0
    %151 = vmatprep.subr.mxu0 0.0
    %152 = vmatpush1.msra.mxu0 0.0
    %153 = vmatprep.subr.mxu0 0.0
    %154 = vmatpush1.msra.mxu0 0.0
    %155 = vmatprep.subr.mxu0 0.0
    %156 = vmatpush1.msra.mxu0 0.0
    %157 = vmatprep.subr.mxu0 0.0
    %158 = vmatpush1.msra.mxu0 0.0
    %159 = vmatprep.subr.mxu0 0.0
    %160 = vmatpush1.msra.mxu0 0.0
    %161 = vmatprep.subr.mxu0 0.0
    %162 = vmatpush1.msra.mxu0 0.0
    %163 = vmatprep.mubr.f32.mxu0 0.0
    %164 = vmatmul.mubr.f32.gmra.mrb[0].mxu0 %v97
    %v165 = vpop.f32.mrb[0].mxu0
    %v166 = vadd.f32 0.0, %v165
    %v167 = vpop.f32.mrb[0].mxu0
    %168 = vdwg.mxu0
    %v169 = vmul.f32 %v90, %v90
    %v170 = vsel %vm95, %v169, 0.0
    %171 = vadd.xlane.f32.xlu0 %v170
    %v172 = vpop.xlane.xlu0 %171
    %v173 = vmax.f32 %v172, 1e-24
    %v174 = vrsqrt.pop %v173
    %v175 = vmul.f32 %v166, %v174
    %v176 = vsub.f32 1.0, %v175
    %177 = vst [vmem:[#allocation11 + $0x18] sm:$0xff] %v176
    %v178 = vlaneseq
    %v179 = vand.u32 %v178, 127
    %vm181 = vcmp.lt.s32.totalorder %v176, 0
    %v182 = vxor.u32 %v176, 2147483647
    %v183 = vsel %vm181, %v182, %v176
    %vm184 = vcmp.lt.s32.totalorder %v179, 8
    %v185 = vand.u32 %v183, 4294967168
    %v186 = vor.u32 %v185, %v179
    %v187 = vsel %vm184, %v186, 2147483647
    %v188 = vand.u32 %v187, 65535
    %v189 = vshra.s32 %v187, 16
    %v190 = vcvt.s32.f32 %v188
    %v191 = vcvt.s32.f32 %v189
    %192 = vmin.xlane.f32.xlu0 %v191
    %v193 = vpop.xlane.xlu0 %192
    %vm194 = vcmp.eq.f32.partialorder %v191, %v193
    %v195 = vsel %vm194, %v190, inf
    %196 = vmin.xlane.f32.xlu0 %v195
    %v197 = vpop.xlane.xlu0 %196
    %v198 = vcvt.f32.s32 %v197
    %v199 = vcvt.f32.s32 %v193
    %v200 = vshll.u32 %v199, 16
    %v201 = vadd.s32 %v200, %v198
    %v202 = vand.u32 %v201, 127
    %vm203 = vcmp.eq.s32.totalorder %v179, %v202
    %vm204 = vcmp.ne.s32.totalorder %v201, 2147483647
    %v205 = vsel %vm204, 1, 0
    %vm206 = vcmp.eq.s32.totalorder %v205, 1
    %vm207 = vmand %vm203, %vm206
    %v208 = vsel %vm207, 1, 0
    %v209 = vcvt.s32.f32 %v208
    %v210 = vadd.f32 %v209, 0.0
    %v211 = vsel %vm207, 2147483647, %v187
    %v212 = vand.u32 %v211, 65535
    %v213 = vshra.s32 %v211, 16
    %v214 = vcvt.s32.f32 %v212
    %v215 = vcvt.s32.f32 %v213
    %216 = vmin.xlane.f32.xlu0 %v215
    %v217 = vpop.xlane.xlu0 %216
    %vm218 = vcmp.eq.f32.partialorder %v215, %v217
    %v219 = vsel %vm218, %v214, inf
    %220 = vmin.xlane.f32.xlu0 %v219
    %v221 = vpop.xlane.xlu0 %220
    %v222 = vcvt.f32.s32 %v221
    %v223 = vcvt.f32.s32 %v217
    %v224 = vshll.u32 %v223, 16
    %v225 = vadd.s32 %v224, %v222
    %v226 = vand.u32 %v225, 127
    %vm227 = vcmp.eq.s32.totalorder %v179, %v226
    %vm228 = vcmp.ne.s32.totalorder %v225, 2147483647
    %v229 = vsel %vm228, 1, 0
    %vm230 = vcmp.eq.s32.totalorder %v229, 1
    %vm231 = vmand %vm227, %vm230
    %v232 = vsel %vm231, 1, 0
    %v233 = vcvt.s32.f32 %v232
    %v234 = vadd.f32 %v210, %v233
    %v235 = vsel %vm231, 2147483647, %v211
    %v236 = vand.u32 %v235, 65535
    %v237 = vshra.s32 %v235, 16
    %v238 = vcvt.s32.f32 %v236
    %v239 = vcvt.s32.f32 %v237
    %240 = vmin.xlane.f32.xlu0 %v239
    %v241 = vpop.xlane.xlu0 %240
    %vm242 = vcmp.eq.f32.partialorder %v239, %v241
    %v243 = vsel %vm242, %v238, inf
    %244 = vmin.xlane.f32.xlu0 %v243
    %v245 = vpop.xlane.xlu0 %244
    %v246 = vcvt.f32.s32 %v245
    %v247 = vcvt.f32.s32 %v241
    %v248 = vshll.u32 %v247, 16
    %v249 = vadd.s32 %v248, %v246
    %v250 = vand.u32 %v249, 127
    %vm251 = vcmp.eq.s32.totalorder %v179, %v250
    %vm252 = vcmp.ne.s32.totalorder %v249, 2147483647
    %v253 = vsel %vm252, 1, 0
    %vm254 = vcmp.eq.s32.totalorder %v253, 1
    %vm255 = vmand %vm251, %vm254
    %v256 = vsel %vm255, 1, 0
    %v257 = vcvt.s32.f32 %v256
    %v258 = vadd.f32 %v234, %v257
    %259 = vst [vmem:[#allocation11 + $0x20] sm:$0xff] %v258
    %v260 = vld [vmem:[#allocation7] sm:$0xff]
    %v261 = vld [vmem:[#allocation7 + $0x8] sm:$0xff]
    %v262 = vld [vmem:[#allocation7 + $0x10] sm:$0xff]
    %v263 = vld [vmem:[#allocation7 + $0x18] sm:$0xff]
    %v264 = vld [vmem:[#allocation7 + $0x20] sm:$0xff]
    %v265 = vld [vmem:[#allocation7 + $0x28] sm:$0xff]
    %v266 = vld [vmem:[#allocation7 + $0x30] sm:$0xff]
    %v267 = vld [vmem:[#allocation7 + $0x38] sm:$0xff]
    %v268 = vld [vmem:[#allocation7 + $0x40] sm:$0xff]
    %v269 = vld [vmem:[#allocation7 + $0x48] sm:$0xff]
    %v270 = vld [vmem:[#allocation7 + $0x50] sm:$0xff]
    %v271 = vld [vmem:[#allocation7 + $0x58] sm:$0xff]
    %v272 = vld [vmem:[%s3] sm:$0x7]
    %v274 = vlaneseq
    %v275 = vshrl.u32 %v274, 7
    %v276 = vsub.s32 0, %v275
    %v277 = vrot.slane %v272, %v276
    %v278 = vlaneseq
    %v279 = vshrl.u32 %v278, 7
    %v280 = vsub.s32 1, %v279
    %v281 = vrot.slane %v272, %v280
    %v282 = vlaneseq
    %v283 = vshrl.u32 %v282, 7
    %v284 = vsub.s32 2, %v283
    %v285 = vrot.slane %v272, %v284
    %289 = vmatprep.subr.mxu0 %v261
    %290 = vmatpush1.msra.mxu0 %v260
    %291 = vmatprep.subr.mxu0 %v264
    %292 = vmatpush1.msra.mxu0 %v263
    %293 = vmatprep.subr.mxu0 %v267
    %294 = vmatpush1.msra.mxu0 %v266
    %295 = vmatprep.subr.mxu0 %v270
    %296 = vmatpush1.msra.mxu0 %v269
    %297 = vmatprep.subr.mxu0 0.0
    %298 = vmatpush1.msra.mxu0 0.0
    %299 = vmatprep.subr.mxu0 0.0
    %300 = vmatpush1.msra.mxu0 0.0
    %301 = vmatprep.subr.mxu0 0.0
    %302 = vmatpush1.msra.mxu0 0.0
    %303 = vmatprep.subr.mxu0 0.0
    %304 = vmatpush1.msra.mxu0 0.0
    %305 = vmatprep.subr.mxu0 0.0
    %306 = vmatpush1.msra.mxu0 0.0
    %307 = vmatprep.subr.mxu0 0.0
    %308 = vmatpush1.msra.mxu0 0.0
    %309 = vmatprep.subr.mxu0 0.0
    %310 = vmatpush1.msra.mxu0 0.0
    %311 = vmatprep.subr.mxu0 0.0
    %312 = vmatpush1.msra.mxu0 0.0
    %313 = vmatprep.subr.mxu0 0.0
    %314 = vmatpush1.msra.mxu0 0.0
    %315 = vmatprep.subr.mxu0 0.0
    %316 = vmatpush1.msra.mxu0 0.0
    %317 = vmatprep.subr.mxu0 0.0
    %318 = vmatpush1.msra.mxu0 0.0
    %319 = vmatprep.subr.mxu0 0.0
    %320 = vmatpush1.msra.mxu0 0.0
    %321 = vmatprep.subr.mxu0 0.0
    %322 = vmatpush1.msra.mxu0 0.0
    %323 = vmatprep.subr.mxu0 0.0
    %324 = vmatpush1.msra.mxu0 0.0
    %325 = vmatprep.subr.mxu0 0.0
    %326 = vmatpush1.msra.mxu0 0.0
    %327 = vmatprep.subr.mxu0 0.0
    %328 = vmatpush1.msra.mxu0 0.0
    %329 = vmatprep.subr.mxu0 0.0
    %330 = vmatpush1.msra.mxu0 0.0
    %331 = vmatprep.subr.mxu0 0.0
    %332 = vmatpush1.msra.mxu0 0.0
    %333 = vmatprep.subr.mxu0 0.0
    %334 = vmatpush1.msra.mxu0 0.0
    %335 = vmatprep.subr.mxu0 0.0
    %336 = vmatpush1.msra.mxu0 0.0
    %337 = vmatprep.subr.mxu0 0.0
    %338 = vmatpush1.msra.mxu0 0.0
    %339 = vmatprep.subr.mxu0 0.0
    %340 = vmatpush1.msra.mxu0 0.0
    %341 = vmatprep.subr.mxu0 0.0
    %342 = vmatpush1.msra.mxu0 0.0
    %343 = vmatprep.subr.mxu0 0.0
    %344 = vmatpush1.msra.mxu0 0.0
    %345 = vmatprep.subr.mxu0 0.0
    %346 = vmatpush1.msra.mxu0 0.0
    %347 = vmatprep.subr.mxu0 0.0
    %348 = vmatpush1.msra.mxu0 0.0
    %349 = vmatprep.subr.mxu0 0.0
    %350 = vmatpush1.msra.mxu0 0.0
    %351 = vmatprep.subr.mxu0 0.0
    %352 = vmatpush1.msra.mxu0 0.0
    %353 = vmatprep.mubr.f32.mxu0 0.0
    %354 = vmatmul.mubr.f32.gmra.mrb[0].mxu0 %v97
    %v355 = vpop.f32.mrb[0].mxu0
    %v356 = vadd.f32 %v277, %v355
    %v357 = vpop.f32.mrb[0].mxu0
    %v358 = vadd.f32 %v281, %v357
    %359 = vdwg.mxu0
    %360 = vmatprep.subr.mxu0 0.0
    %361 = vmatpush1.msra.mxu0 %v262
    %362 = vmatprep.subr.mxu0 0.0
    %363 = vmatpush1.msra.mxu0 %v265
    %364 = vmatprep.subr.mxu0 0.0
    %365 = vmatpush1.msra.mxu0 %v268
    %366 = vmatprep.subr.mxu0 0.0
    %367 = vmatpush1.msra.mxu0 %v271
    %368 = vmatprep.subr.mxu0 0.0
    %369 = vmatpush1.msra.mxu0 0.0
    %370 = vmatprep.subr.mxu0 0.0
    %371 = vmatpush1.msra.mxu0 0.0
    %372 = vmatprep.subr.mxu0 0.0
    %373 = vmatpush1.msra.mxu0 0.0
    %374 = vmatprep.subr.mxu0 0.0
    %375 = vmatpush1.msra.mxu0 0.0
    %376 = vmatprep.subr.mxu0 0.0
    %377 = vmatpush1.msra.mxu0 0.0
    %378 = vmatprep.subr.mxu0 0.0
    %379 = vmatpush1.msra.mxu0 0.0
    %380 = vmatprep.subr.mxu0 0.0
    %381 = vmatpush1.msra.mxu0 0.0
    %382 = vmatprep.subr.mxu0 0.0
    %383 = vmatpush1.msra.mxu0 0.0
    %384 = vmatprep.subr.mxu0 0.0
    %385 = vmatpush1.msra.mxu0 0.0
    %386 = vmatprep.subr.mxu0 0.0
    %387 = vmatpush1.msra.mxu0 0.0
    %388 = vmatprep.subr.mxu0 0.0
    %389 = vmatpush1.msra.mxu0 0.0
    %390 = vmatprep.subr.mxu0 0.0
    %391 = vmatpush1.msra.mxu0 0.0
    %392 = vmatprep.subr.mxu0 0.0
    %393 = vmatpush1.msra.mxu0 0.0
    %394 = vmatprep.subr.mxu0 0.0
    %395 = vmatpush1.msra.mxu0 0.0
    %396 = vmatprep.subr.mxu0 0.0
    %397 = vmatpush1.msra.mxu0 0.0
    %398 = vmatprep.subr.mxu0 0.0
    %399 = vmatpush1.msra.mxu0 0.0
    %400 = vmatprep.subr.mxu0 0.0
    %401 = vmatpush1.msra.mxu0 0.0
    %402 = vmatprep.subr.mxu0 0.0
    %403 = vmatpush1.msra.mxu0 0.0
    %404 = vmatprep.subr.mxu0 0.0
    %405 = vmatpush1.msra.mxu0 0.0
    %406 = vmatprep.subr.mxu0 0.0
    %407 = vmatpush1.msra.mxu0 0.0
    %408 = vmatprep.subr.mxu0 0.0
    %409 = vmatpush1.msra.mxu0 0.0
    %410 = vmatprep.subr.mxu0 0.0
    %411 = vmatpush1.msra.mxu0 0.0
    %412 = vmatprep.subr.mxu0 0.0
    %413 = vmatpush1.msra.mxu0 0.0
    %414 = vmatprep.subr.mxu0 0.0
    %415 = vmatpush1.msra.mxu0 0.0
    %416 = vmatprep.subr.mxu0 0.0
    %417 = vmatpush1.msra.mxu0 0.0
    %418 = vmatprep.subr.mxu0 0.0
    %419 = vmatpush1.msra.mxu0 0.0
    %420 = vmatprep.subr.mxu0 0.0
    %421 = vmatpush1.msra.mxu0 0.0
    %422 = vmatprep.subr.mxu0 0.0
    %423 = vmatpush1.msra.mxu0 0.0
    %424 = vmatprep.mubr.f32.mxu0 0.0
    %425 = vmatmul.mubr.f32.gmra.mrb[0].mxu0 %v97
    %v426 = vpop.f32.mrb[0].mxu0
    %v427 = vadd.f32 %v285, %v426
    %v428 = vpop.f32.mrb[0].mxu0
    %429 = vdwg.mxu0
    %vm430 = vcmp.lt.s32.totalorder %v179, 10
    %v431 = vsel %vm430, %v356, -1e+30
    %432 = vmax.xlane.f32.xlu0 %v431
    %v433 = vpop.xlane.xlu0 %432
    %v434 = vsub.f32 %v431, %v433
    %v435 = vmul.f32 %v434, 1.442695
    %v436 = vpow.pop %v435
    %437 = vadd.xlane.f32.xlu0 %v436
    %v438 = vpop.xlane.xlu0 %437
    %v439 = vlog2.pop %v438
    %v440 = vmul.f32 %v439, 0.6931472
    %v441 = vadd.f32 %v440, %v433
    %v442 = vsub.f32 %v356, %v441
    %443 = vst [vmem:[#allocation11 + $0x10] sm:$0xff] %v442
    %v444 = vmul.f32 %v358, 0.1
    %v445 = vtanh.pop %v444
    %v446 = vmul.f32 %v445, 10.0
    %447 = vst [vmem:[#allocation11 + $0x8] sm:$0xff] %v446
    %v448 = vmul.f32 %v427, 0.1
    %v449 = vtanh.pop %v448
    %v450 = vmul.f32 %v449, 10.0
    %v451 = vmul.f32 %v175, %v258
    %452 = vadd.xlane.f32.xlu0 %v451
    %v453 = vpop.xlane.xlu0 %452
    %v454 = vld [vmem:[#allocation8] sm:$0xff]
    %v455 = vld [vmem:[#allocation8 + $0x8] sm:$0xff]
    %v456 = vld [vmem:[#allocation8 + $0x10] sm:$0xff]
    %v457 = vld [vmem:[#allocation8 + $0x18] sm:$0xff]
    %v458 = vld [vmem:[#allocation8 + $0x20] sm:$0xff]
    %v459 = vld [vmem:[#allocation8 + $0x28] sm:$0xff]
    %v460 = vld [vmem:[#allocation8 + $0x30] sm:$0xff]
    %v461 = vld [vmem:[#allocation8 + $0x38] sm:$0xff]
    %v462 = vld [vmem:[#allocation8 + $0x40] sm:$0xff]
    %v463 = vld [vmem:[#allocation8 + $0x48] sm:$0xff]
    %v464 = vld [vmem:[#allocation8 + $0x50] sm:$0xff]
    %v465 = vld [vmem:[#allocation8 + $0x58] sm:$0xff]
    %v466 = vld [vmem:[#allocation8 + $0x60] sm:$0xff]
    %v467 = vld [vmem:[#allocation8 + $0x68] sm:$0xff]
    %v468 = vld [vmem:[#allocation8 + $0x70] sm:$0xff]
    %v469 = vld [vmem:[#allocation8 + $0x78] sm:$0xff]
    %470 = vmatprep.subr.mxu0 0.0
    %471 = vmatpush1.msra.mxu0 %v454
    %472 = vmatprep.subr.mxu0 0.0
    %473 = vmatpush1.msra.mxu0 %v455
    %474 = vmatprep.subr.mxu0 0.0
    %475 = vmatpush1.msra.mxu0 %v456
    %476 = vmatprep.subr.mxu0 0.0
    %477 = vmatpush1.msra.mxu0 %v457
    %478 = vmatprep.subr.mxu0 0.0
    %479 = vmatpush1.msra.mxu0 %v458
    %480 = vmatprep.subr.mxu0 0.0
    %481 = vmatpush1.msra.mxu0 %v459
    %482 = vmatprep.subr.mxu0 0.0
    %483 = vmatpush1.msra.mxu0 %v460
    %484 = vmatprep.subr.mxu0 0.0
    %485 = vmatpush1.msra.mxu0 %v461
    %486 = vmatprep.subr.mxu0 0.0
    %487 = vmatpush1.msra.mxu0 %v462
    %488 = vmatprep.subr.mxu0 0.0
    %489 = vmatpush1.msra.mxu0 %v463
    %490 = vmatprep.subr.mxu0 0.0
    %491 = vmatpush1.msra.mxu0 %v464
    %492 = vmatprep.subr.mxu0 0.0
    %493 = vmatpush1.msra.mxu0 %v465
    %494 = vmatprep.subr.mxu0 0.0
    %495 = vmatpush1.msra.mxu0 %v466
    %496 = vmatprep.subr.mxu0 0.0
    %497 = vmatpush1.msra.mxu0 %v467
    %498 = vmatprep.subr.mxu0 0.0
    %499 = vmatpush1.msra.mxu0 %v468
    %500 = vmatprep.subr.mxu0 0.0
    %501 = vmatpush1.msra.mxu0 %v469
    %502 = vmatprep.subr.mxu0 0.0
    %503 = vmatpush1.msra.mxu0 0.0
    %504 = vmatprep.subr.mxu0 0.0
    %505 = vmatpush1.msra.mxu0 0.0
    %506 = vmatprep.subr.mxu0 0.0
    %507 = vmatpush1.msra.mxu0 0.0
    %508 = vmatprep.subr.mxu0 0.0
    %509 = vmatpush1.msra.mxu0 0.0
    %510 = vmatprep.subr.mxu0 0.0
    %511 = vmatpush1.msra.mxu0 0.0
    %512 = vmatprep.subr.mxu0 0.0
    %513 = vmatpush1.msra.mxu0 0.0
    %514 = vmatprep.subr.mxu0 0.0
    %515 = vmatpush1.msra.mxu0 0.0
    %516 = vmatprep.subr.mxu0 0.0
    %517 = vmatpush1.msra.mxu0 0.0
    %518 = vmatprep.subr.mxu0 0.0
    %519 = vmatpush1.msra.mxu0 0.0
    %520 = vmatprep.subr.mxu0 0.0
    %521 = vmatpush1.msra.mxu0 0.0
    %522 = vmatprep.subr.mxu0 0.0
    %523 = vmatpush1.msra.mxu0 0.0
    %524 = vmatprep.subr.mxu0 0.0
    %525 = vmatpush1.msra.mxu0 0.0
    %526 = vmatprep.subr.mxu0 0.0
    %527 = vmatpush1.msra.mxu0 0.0
    %528 = vmatprep.subr.mxu0 0.0
    %529 = vmatpush1.msra.mxu0 0.0
    %530 = vmatprep.subr.mxu0 0.0
    %531 = vmatpush1.msra.mxu0 0.0
    %532 = vmatprep.subr.mxu0 0.0
    %533 = vmatpush1.msra.mxu0 0.0
    %534 = vmatprep.mubr.f32.mxu0 0.0
    %535 = vmatmul.mubr.f32.gmra.mrb[0].mxu0 %v451
    %v536 = vpop.f32.mrb[0].mxu0
    %v537 = vadd.f32 0.0, %v536
    %v538 = vpop.f32.mrb[0].mxu0
    %539 = vdwg.mxu0
    %v540 = vmul.f32 %v450, %v537
    %v541 = vld [vmem:[#allocation10] sm:$0xff]
    %v542 = vld [vmem:[#allocation10 + $0x8] sm:$0xff]
    %v543 = vld [vmem:[#allocation10 + $0x10] sm:$0xff]
    %v544 = vld [vmem:[#allocation10 + $0x18] sm:$0xff]
    %v545 = vld [vmem:[#allocation10 + $0x20] sm:$0xff]
    %v546 = vld [vmem:[#allocation10 + $0x28] sm:$0xff]
    %v547 = vld [vmem:[#allocation10 + $0x30] sm:$0xff]
    %v548 = vld [vmem:[#allocation10 + $0x38] sm:$0xff]
    %v549 = vld [vmem:[#allocation10 + $0x40] sm:$0xff]
    %v550 = vld [vmem:[#allocation10 + $0x48] sm:$0xff]
    %v551 = vld [vmem:[#allocation10 + $0x50] sm:$0xff]
    %v552 = vld [vmem:[#allocation10 + $0x58] sm:$0xff]
    %v553 = vld [vmem:[#allocation10 + $0x60] sm:$0xff]
    %v554 = vld [vmem:[#allocation10 + $0x68] sm:$0xff]
    %v555 = vld [vmem:[#allocation10 + $0x70] sm:$0xff]
    %v556 = vld [vmem:[#allocation10 + $0x78] sm:$0xff]
    %557 = vmatprep.subr.mxu0 0.0
    %558 = vmatpush1.msra.mxu0 %v541
    %559 = vmatprep.subr.mxu0 0.0
    %560 = vmatpush1.msra.mxu0 %v542
    %561 = vmatprep.subr.mxu0 0.0
    %562 = vmatpush1.msra.mxu0 %v543
    %563 = vmatprep.subr.mxu0 0.0
    %564 = vmatpush1.msra.mxu0 %v544
    %565 = vmatprep.subr.mxu0 0.0
    %566 = vmatpush1.msra.mxu0 %v545
    %567 = vmatprep.subr.mxu0 0.0
    %568 = vmatpush1.msra.mxu0 %v546
    %569 = vmatprep.subr.mxu0 0.0
    %570 = vmatpush1.msra.mxu0 %v547
    %571 = vmatprep.subr.mxu0 0.0
    %572 = vmatpush1.msra.mxu0 %v548
    %573 = vmatprep.subr.mxu0 0.0
    %574 = vmatpush1.msra.mxu0 %v549
    %575 = vmatprep.subr.mxu0 0.0
    %576 = vmatpush1.msra.mxu0 %v550
    %577 = vmatprep.subr.mxu0 0.0
    %578 = vmatpush1.msra.mxu0 %v551
    %579 = vmatprep.subr.mxu0 0.0
    %580 = vmatpush1.msra.mxu0 %v552
    %581 = vmatprep.subr.mxu0 0.0
    %582 = vmatpush1.msra.mxu0 %v553
    %583 = vmatprep.subr.mxu0 0.0
    %584 = vmatpush1.msra.mxu0 %v554
    %585 = vmatprep.subr.mxu0 0.0
    %586 = vmatpush1.msra.mxu0 %v555
    %587 = vmatprep.subr.mxu0 0.0
    %588 = vmatpush1.msra.mxu0 %v556
    %589 = vmatprep.subr.mxu0 0.0
    %590 = vmatpush1.msra.mxu0 0.0
    %591 = vmatprep.subr.mxu0 0.0
    %592 = vmatpush1.msra.mxu0 0.0
    %593 = vmatprep.subr.mxu0 0.0
    %594 = vmatpush1.msra.mxu0 0.0
    %595 = vmatprep.subr.mxu0 0.0
    %596 = vmatpush1.msra.mxu0 0.0
    %597 = vmatprep.subr.mxu0 0.0
    %598 = vmatpush1.msra.mxu0 0.0
    %599 = vmatprep.subr.mxu0 0.0
    %600 = vmatpush1.msra.mxu0 0.0
    %601 = vmatprep.subr.mxu0 0.0
    %602 = vmatpush1.msra.mxu0 0.0
    %603 = vmatprep.subr.mxu0 0.0
    %604 = vmatpush1.msra.mxu0 0.0
    %605 = vmatprep.subr.mxu0 0.0
    %606 = vmatpush1.msra.mxu0 0.0
    %607 = vmatprep.subr.mxu0 0.0
    %608 = vmatpush1.msra.mxu0 0.0
    %609 = vmatprep.subr.mxu0 0.0
    %610 = vmatpush1.msra.mxu0 0.0
    %611 = vmatprep.subr.mxu0 0.0
    %612 = vmatpush1.msra.mxu0 0.0
    %613 = vmatprep.subr.mxu0 0.0
    %614 = vmatpush1.msra.mxu0 0.0
    %615 = vmatprep.subr.mxu0 0.0
    %616 = vmatpush1.msra.mxu0 0.0
    %617 = vmatprep.subr.mxu0 0.0
    %618 = vmatpush1.msra.mxu0 0.0
    %619 = vmatprep.subr.mxu0 0.0
    %620 = vmatpush1.msra.mxu0 0.0
    %621 = vmatprep.mubr.f32.mxu0 0.0
    %622 = vmatmul.mubr.f32.gmra.mrb[0].mxu0 %v540
    %v623 = vpop.f32.mrb[0].mxu0
    %v624 = vadd.f32 0.0, %v623
    %v625 = vpop.f32.mrb[0].mxu0
    %626 = vdwg.mxu0
    %v627 = vrcp.pop %v453
    %v628 = vmul.f32 %v453, %v627
    %v629 = vsub.f32 2.0, %v628
    %v630 = vmul.f32 %v627, %v629
    %v631 = vmul.f32 %v624, %v630
    %632 = vst [vmem:[#allocation11] sm:$0xff] %v631
    // Predicated region
    $region46: #{tpu_custom_call.1} parent=1 // pred_check
      _
    $region47: #{tpu_custom_call.1} parent=1 // pred_check_branch
      %634 = sbr.rel (0) target = $region49
    $region48: #{tpu_custom_call.1} parent=1 // pred_region
      %s636 = ssub.s32 640, 640
      %637 = vsyncadd [#allocation4], %s636
      %s639 = sshll.u32 [#allocation11], 4
      %s640 = int_to_ptr.vmem [resolvable:$true] %s639
      %642 = dma.vmem_to_hbm [thread:$0]  %s640, 640, %s6, [#allocation4]
    $region49: #{tpu_custom_call.1} parent=1 // pred_fallthru
      _
    // Predicated region
    $region50: #{tpu_custom_call.1} parent=1 // pred_check
      _
    $region51: #{tpu_custom_call.1} parent=1 // pred_check_branch
      %644 = sbr.rel (0) target = $region53
    $region52: #{tpu_custom_call.1} parent=1 // pred_region
      %645 = dma.done [#allocation4], 640
    $region53: #{tpu_custom_call.1} parent=1 // pred_fallthru
      _
    %646 = vsyncpa [#allocation3], 1
    %647 = vsyncpa [#allocation6], 1
    %648 = vsyncpa [#allocation9], 1
    %649 = vsyncpa [#allocation4], 1

// kernel: tpu_custom_call.1
$region0: #{tpu_custom_call.1}
  #allocation0 [shape = 'u32[]', space=smem, size = 0x4, offset = 0x4, fixed_abs, tag = 'smem constant byte address 0x4 - core index']
  #allocation1 [shape = 'u32[144,128]{1,0:T(1,128)}', space=vmem, size = 0x12000, scoped, tag = 'internal scratch']
  %s0 = inlined_call_operand.hbm [shape: f32[8,32], index: 0, kind: input, shape index: {}]
  %s1 = inlined_call_operand.hbm [shape: f32[32,128], index: 1, kind: input, shape index: {}]
  %s2 = inlined_call_operand.hbm [shape: f32[32,384], index: 2, kind: input, shape index: {}]
  %s3 = inlined_call_operand.vmem [shape: f32[1,384], index: 3, kind: input, shape index: {}]
  %s4 = inlined_call_operand.hbm [shape: f32[128,128], index: 4, kind: input, shape index: {}]
  %s5 = inlined_call_operand.hbm [shape: f32[128,128], index: 5, kind: input, shape index: {}]
  %s6 = inlined_call_operand.hbm [shape: f32[8,640], index: 6, kind: output, shape index: {}]
  %s7 = sld [smem:[#allocation0]]
  $region54: #{tpu_custom_call.1} parent=0
    _
  %s9 = ssub.s32 1, %s7
  %s10 = scalar_select 0, %s9, %s7
  $region1: #{tpu_custom_call.1} parent=0
    #allocation2 [shape = 'u8[4096]{0}', space=vmem, size = 0x1000, scoped, tag = 'input window, operand 0, single buffered']
    #allocation3 [shape = 's32[1]{0}', space=sflag, size = 0x4, scoped, tag = 'scoped memory for tpu_custom_call.1']
    #allocation4 [shape = 's32[1]{0}', space=sflag, size = 0x4, scoped, tag = 'scoped memory for tpu_custom_call.1']
    #allocation5 [shape = 'u8[16384]{0}', space=vmem, size = 0x4000, scoped, tag = 'input window, operand 1, single buffered']
    #allocation6 [shape = 's32[1]{0}', space=sflag, size = 0x4, scoped, tag = 'scoped memory for tpu_custom_call.1']
    #allocation7 [shape = 'u8[49152]{0}', space=vmem, size = 0xc000, scoped, tag = 'input window, operand 2, single buffered']
    #allocation8 [shape = 'u8[65536]{0}', space=vmem, size = 0x10000, scoped, tag = 'input window, operand 4, single buffered']
    #allocation9 [shape = 's32[1]{0}', space=sflag, size = 0x4, scoped, tag = 'scoped memory for tpu_custom_call.1']
    #allocation10 [shape = 'u8[65536]{0}', space=vmem, size = 0x10000, scoped, tag = 'input window, operand 5, single buffered']
    #allocation11 [shape = 'u8[20480]{0}', space=vmem, size = 0x5000, scoped, tag = 'output window, operand 0, single buffered']
    %11 = vsyncpa [#allocation3], 0
    %12 = vsyncpa [#allocation6], 0
    %13 = vsyncpa [#allocation9], 0
    %14 = vsyncpa [#allocation4], 0
    // Predicated region
    $region2: #{tpu_custom_call.1} parent=1 // pred_check
      _
    $region3: #{tpu_custom_call.1} parent=1 // pred_check_branch
      %16 = sbr.rel (0) target = $region5
    $region4: #{tpu_custom_call.1} parent=1 // pred_region
      %s18 = ssub.s32 128, 128
      %19 = vsyncadd [#allocation3], %s18
      %s21 = sshll.u32 [#allocation2], 4
      %s22 = int_to_ptr.vmem [resolvable:$true] %s21
      %24 = dma.hbm_to_vmem [thread:$0]  %s0, 128, %s22, [#allocation3]
    $region5: #{tpu_custom_call.1} parent=1 // pred_fallthru
      _
    // Predicated region
    $region6: #{tpu_custom_call.1} parent=1 // pred_check
      _
    $region7: #{tpu_custom_call.1} parent=1 // pred_check_branch
      %26 = sbr.rel (0) target = $region9
    $region8: #{tpu_custom_call.1} parent=1 // pred_region
      %s28 = ssub.s32 512, 512
      %29 = vsyncadd [#allocation6], %s28
      %s30 = sshll.u32 [#allocation5], 4
      %s31 = int_to_ptr.vmem [resolvable:$true] %s30
      %36 = dma.hbm_to_vmem [thread:$0]  %s1, 512, %s31, [#allocation6], 128, 128, 8
    $region9: #{tpu_custom_call.1} parent=1 // pred_fallthru
      _
    // Predicated region
    $region10: #{tpu_custom_call.1} parent=1 // pred_check
      _
    $region11: #{tpu_custom_call.1} parent=1 // pred_check_branch
      %38 = sbr.rel (0) target = $region13
    $region12: #{tpu_custom_call.1} parent=1 // pred_region
      %s40 = ssub.s32 1536, 1536
      %41 = vsyncadd [#allocation6], %s40
      %s42 = sshll.u32 [#allocation7], 4
      %s43 = int_to_ptr.vmem [resolvable:$true] %s42
      %48 = dma.hbm_to_vmem [thread:$0]  %s2, 1536, %s43, [#allocation6], 384, 384, 24
    $region13: #{tpu_custom_call.1} parent=1 // pred_fallthru
      _
    // Predicated region
    $region14: #{tpu_custom_call.1} parent=1 // pred_check
      _
    $region15: #{tpu_custom_call.1} parent=1 // pred_check_branch
      %50 = sbr.rel (0) target = $region17
    $region16: #{tpu_custom_call.1} parent=1 // pred_region
      _
    $region17: #{tpu_custom_call.1} parent=1 // pred_fallthru
      _
    // Predicated region
    $region18: #{tpu_custom_call.1} parent=1 // pred_check
      _
    $region19: #{tpu_custom_call.1} parent=1 // pred_check_branch
      %52 = sbr.rel (0) target = $region21
    $region20: #{tpu_custom_call.1} parent=1 // pred_region
      %s54 = ssub.s32 2048, 2048
      %55 = vsyncadd [#allocation9], %s54
      %s56 = sshll.u32 [#allocation8], 4
      %s57 = int_to_ptr.vmem [resolvable:$true] %s56
      %62 = dma.hbm_to_vmem [thread:$0]  %s4, 2048, %s57, [#allocation9], 128, 128, 8
    $region21: #{tpu_custom_call.1} parent=1 // pred_fallthru
      _
    // Predicated region
    $region22: #{tpu_custom_call.1} parent=1 // pred_check
      _
    $region23: #{tpu_custom_call.1} parent=1 // pred_check_branch
      %64 = sbr.rel (0) target = $region25
    $region24: #{tpu_custom_call.1} parent=1 // pred_region
      %s66 = ssub.s32 2048, 2048
      %67 = vsyncadd [#allocation9], %s66
      %s68 = sshll.u32 [#allocation10], 4
      %s69 = int_to_ptr.vmem [resolvable:$true] %s68
      %74 = dma.hbm_to_vmem [thread:$0]  %s5, 2048, %s69, [#allocation9], 128, 128, 8
    $region25: #{tpu_custom_call.1} parent=1 // pred_fallthru
      _
    // Predicated region
    $region26: #{tpu_custom_call.1} parent=1 // pred_check
      _
    $region27: #{tpu_custom_call.1} parent=1 // pred_check_branch
      %76 = sbr.rel (0) target = $region29
    $region28: #{tpu_custom_call.1} parent=1 // pred_region
      %77 = dma.done [#allocation3], 128
    $region29: #{tpu_custom_call.1} parent=1 // pred_fallthru
      _
    // Predicated region
    $region30: #{tpu_custom_call.1} parent=1 // pred_check
      _
    $region31: #{tpu_custom_call.1} parent=1 // pred_check_branch
      %79 = sbr.rel (0) target = $region33
    $region32: #{tpu_custom_call.1} parent=1 // pred_region
      %80 = dma.done [#allocation6], 512
    $region33: #{tpu_custom_call.1} parent=1 // pred_fallthru
      _
    // Predicated region
    $region34: #{tpu_custom_call.1} parent=1 // pred_check
      _
    $region35: #{tpu_custom_call.1} parent=1 // pred_check_branch
      %82 = sbr.rel (0) target = $region37
    $region36: #{tpu_custom_call.1} parent=1 // pred_region
      %83 = dma.done [#allocation6], 1536
    $region37: #{tpu_custom_call.1} parent=1 // pred_fallthru
      _
    // Predicated region
    $region38: #{tpu_custom_call.1} parent=1 // pred_check
      _
    $region39: #{tpu_custom_call.1} parent=1 // pred_check_branch
      %85 = sbr.rel (0) target = $region41
    $region40: #{tpu_custom_call.1} parent=1 // pred_region
      %86 = dma.done [#allocation9], 2048
    $region41: #{tpu_custom_call.1} parent=1 // pred_fallthru
      _
    // Predicated region
    $region42: #{tpu_custom_call.1} parent=1 // pred_check
      _
    $region43: #{tpu_custom_call.1} parent=1 // pred_check_branch
      %88 = sbr.rel (0) target = $region45
    $region44: #{tpu_custom_call.1} parent=1 // pred_region
      %89 = dma.done [#allocation9], 2048
    $region45: #{tpu_custom_call.1} parent=1 // pred_fallthru
      _
    %v90 = vld [vmem:[#allocation2] sm:$0xff]
    %v91 = vld [vmem:[#allocation5] sm:$0xff]
    %v92 = vld [vmem:[#allocation5 + $0x8] sm:$0xff]
    %v93 = vld [vmem:[#allocation5 + $0x10] sm:$0xff]
    %v94 = vld [vmem:[#allocation5 + $0x18] sm:$0xff]
    %vm95 = vcmask 261120
    %v97 = vsel %vm95, %v90, 0
    %99 = vmatprep.subr.mxu0 0.0
    %100 = vmatpush1.msra.mxu0 %v91
    %101 = vmatprep.subr.mxu0 0.0
    %102 = vmatpush1.msra.mxu0 %v92
    %103 = vmatprep.subr.mxu0 0.0
    %104 = vmatpush1.msra.mxu0 %v93
    %105 = vmatprep.subr.mxu0 0.0
    %106 = vmatpush1.msra.mxu0 %v94
    %107 = vmatprep.subr.mxu0 0.0
    %108 = vmatpush1.msra.mxu0 0.0
    %109 = vmatprep.subr.mxu0 0.0
    %110 = vmatpush1.msra.mxu0 0.0
    %111 = vmatprep.subr.mxu0 0.0
    %112 = vmatpush1.msra.mxu0 0.0
    %113 = vmatprep.subr.mxu0 0.0
    %114 = vmatpush1.msra.mxu0 0.0
    %115 = vmatprep.subr.mxu0 0.0
    %116 = vmatpush1.msra.mxu0 0.0
    %117 = vmatprep.subr.mxu0 0.0
    %118 = vmatpush1.msra.mxu0 0.0
    %119 = vmatprep.subr.mxu0 0.0
    %120 = vmatpush1.msra.mxu0 0.0
    %121 = vmatprep.subr.mxu0 0.0
    %122 = vmatpush1.msra.mxu0 0.0
    %123 = vmatprep.subr.mxu0 0.0
    %124 = vmatpush1.msra.mxu0 0.0
    %125 = vmatprep.subr.mxu0 0.0
    %126 = vmatpush1.msra.mxu0 0.0
    %127 = vmatprep.subr.mxu0 0.0
    %128 = vmatpush1.msra.mxu0 0.0
    %129 = vmatprep.subr.mxu0 0.0
    %130 = vmatpush1.msra.mxu0 0.0
    %131 = vmatprep.subr.mxu0 0.0
    %132 = vmatpush1.msra.mxu0 0.0
    %133 = vmatprep.subr.mxu0 0.0
    %134 = vmatpush1.msra.mxu0 0.0
    %135 = vmatprep.subr.mxu0 0.0
    %136 = vmatpush1.msra.mxu0 0.0
    %137 = vmatprep.subr.mxu0 0.0
    %138 = vmatpush1.msra.mxu0 0.0
    %139 = vmatprep.subr.mxu0 0.0
    %140 = vmatpush1.msra.mxu0 0.0
    %141 = vmatprep.subr.mxu0 0.0
    %142 = vmatpush1.msra.mxu0 0.0
    %143 = vmatprep.subr.mxu0 0.0
    %144 = vmatpush1.msra.mxu0 0.0
    %145 = vmatprep.subr.mxu0 0.0
    %146 = vmatpush1.msra.mxu0 0.0
    %147 = vmatprep.subr.mxu0 0.0
    %148 = vmatpush1.msra.mxu0 0.0
    %149 = vmatprep.subr.mxu0 0.0
    %150 = vmatpush1.msra.mxu0 0.0
    %151 = vmatprep.subr.mxu0 0.0
    %152 = vmatpush1.msra.mxu0 0.0
    %153 = vmatprep.subr.mxu0 0.0
    %154 = vmatpush1.msra.mxu0 0.0
    %155 = vmatprep.subr.mxu0 0.0
    %156 = vmatpush1.msra.mxu0 0.0
    %157 = vmatprep.subr.mxu0 0.0
    %158 = vmatpush1.msra.mxu0 0.0
    %159 = vmatprep.subr.mxu0 0.0
    %160 = vmatpush1.msra.mxu0 0.0
    %161 = vmatprep.subr.mxu0 0.0
    %162 = vmatpush1.msra.mxu0 0.0
    %163 = vmatprep.mubr.f32.mxu0 0.0
    %164 = vmatmul.mubr.f32.gmra.mrb[0].mxu0 %v97
    %v165 = vpop.f32.mrb[0].mxu0
    %v166 = vadd.f32 0.0, %v165
    %v167 = vpop.f32.mrb[0].mxu0
    %168 = vdwg.mxu0
    %v169 = vmul.f32 %v90, %v90
    %v170 = vsel %vm95, %v169, 0.0
    %171 = vadd.xlane.f32.xlu0 %v170
    %v172 = vpop.xlane.xlu0 %171
    %v173 = vmax.f32 %v172, 1e-24
    %v174 = vrsqrt.pop %v173
    %v175 = vmul.f32 %v166, %v174
    %v176 = vsub.f32 1.0, %v175
    %177 = vst [vmem:[#allocation11 + $0x18] sm:$0xff] %v176
    %v178 = vlaneseq
    %v179 = vand.u32 %v178, 127
    %vm181 = vcmp.lt.s32.totalorder %v176, 0
    %v182 = vxor.u32 %v176, 2147483647
    %v183 = vsel %vm181, %v182, %v176
    %vm184 = vcmp.lt.s32.totalorder %v179, 8
    %v185 = vand.u32 %v183, 4294967168
    %v186 = vor.u32 %v185, %v179
    %v187 = vsel %vm184, %v186, 2147483647
    %v188 = vand.u32 %v187, 65535
    %v189 = vshra.s32 %v187, 16
    %v190 = vcvt.s32.f32 %v188
    %v191 = vcvt.s32.f32 %v189
    %192 = vmin.xlane.f32.xlu0 %v191
    %v193 = vpop.xlane.xlu0 %192
    %vm194 = vcmp.eq.f32.partialorder %v191, %v193
    %v195 = vsel %vm194, %v190, inf
    %196 = vmin.xlane.f32.xlu0 %v195
    %v197 = vpop.xlane.xlu0 %196
    %v198 = vcvt.f32.s32 %v197
    %v199 = vcvt.f32.s32 %v193
    %v200 = vshll.u32 %v199, 16
    %v201 = vadd.s32 %v200, %v198
    %v202 = vand.u32 %v201, 127
    %vm203 = vcmp.eq.s32.totalorder %v179, %v202
    %vm204 = vcmp.ne.s32.totalorder %v201, 2147483647
    %v205 = vsel %vm204, 1, 0
    %vm206 = vcmp.eq.s32.totalorder %v205, 1
    %vm207 = vmand %vm203, %vm206
    %v208 = vsel %vm207, 1, 0
    %v209 = vcvt.s32.f32 %v208
    %v210 = vadd.f32 %v209, 0.0
    %v211 = vsel %vm207, 2147483647, %v187
    %v212 = vand.u32 %v211, 65535
    %v213 = vshra.s32 %v211, 16
    %v214 = vcvt.s32.f32 %v212
    %v215 = vcvt.s32.f32 %v213
    %216 = vmin.xlane.f32.xlu0 %v215
    %v217 = vpop.xlane.xlu0 %216
    %vm218 = vcmp.eq.f32.partialorder %v215, %v217
    %v219 = vsel %vm218, %v214, inf
    %220 = vmin.xlane.f32.xlu0 %v219
    %v221 = vpop.xlane.xlu0 %220
    %v222 = vcvt.f32.s32 %v221
    %v223 = vcvt.f32.s32 %v217
    %v224 = vshll.u32 %v223, 16
    %v225 = vadd.s32 %v224, %v222
    %v226 = vand.u32 %v225, 127
    %vm227 = vcmp.eq.s32.totalorder %v179, %v226
    %vm228 = vcmp.ne.s32.totalorder %v225, 2147483647
    %v229 = vsel %vm228, 1, 0
    %vm230 = vcmp.eq.s32.totalorder %v229, 1
    %vm231 = vmand %vm227, %vm230
    %v232 = vsel %vm231, 1, 0
    %v233 = vcvt.s32.f32 %v232
    %v234 = vadd.f32 %v210, %v233
    %v235 = vsel %vm231, 2147483647, %v211
    %v236 = vand.u32 %v235, 65535
    %v237 = vshra.s32 %v235, 16
    %v238 = vcvt.s32.f32 %v236
    %v239 = vcvt.s32.f32 %v237
    %240 = vmin.xlane.f32.xlu0 %v239
    %v241 = vpop.xlane.xlu0 %240
    %vm242 = vcmp.eq.f32.partialorder %v239, %v241
    %v243 = vsel %vm242, %v238, inf
    %244 = vmin.xlane.f32.xlu0 %v243
    %v245 = vpop.xlane.xlu0 %244
    %v246 = vcvt.f32.s32 %v245
    %v247 = vcvt.f32.s32 %v241
    %v248 = vshll.u32 %v247, 16
    %v249 = vadd.s32 %v248, %v246
    %v250 = vand.u32 %v249, 127
    %vm251 = vcmp.eq.s32.totalorder %v179, %v250
    %vm252 = vcmp.ne.s32.totalorder %v249, 2147483647
    %v253 = vsel %vm252, 1, 0
    %vm254 = vcmp.eq.s32.totalorder %v253, 1
    %vm255 = vmand %vm251, %vm254
    %v256 = vsel %vm255, 1, 0
    %v257 = vcvt.s32.f32 %v256
    %v258 = vadd.f32 %v234, %v257
    %259 = vst [vmem:[#allocation11 + $0x20] sm:$0xff] %v258
    %v260 = vld [vmem:[#allocation7] sm:$0xff]
    %v261 = vld [vmem:[#allocation7 + $0x8] sm:$0xff]
    %v262 = vld [vmem:[#allocation7 + $0x10] sm:$0xff]
    %v263 = vld [vmem:[#allocation7 + $0x18] sm:$0xff]
    %v264 = vld [vmem:[#allocation7 + $0x20] sm:$0xff]
    %v265 = vld [vmem:[#allocation7 + $0x28] sm:$0xff]
    %v266 = vld [vmem:[#allocation7 + $0x30] sm:$0xff]
    %v267 = vld [vmem:[#allocation7 + $0x38] sm:$0xff]
    %v268 = vld [vmem:[#allocation7 + $0x40] sm:$0xff]
    %v269 = vld [vmem:[#allocation7 + $0x48] sm:$0xff]
    %v270 = vld [vmem:[#allocation7 + $0x50] sm:$0xff]
    %v271 = vld [vmem:[#allocation7 + $0x58] sm:$0xff]
    %v272 = vld [vmem:[%s3] sm:$0x7]
    %v274 = vlaneseq
    %v275 = vshrl.u32 %v274, 7
    %v276 = vsub.s32 0, %v275
    %v277 = vrot.slane %v272, %v276
    %v278 = vlaneseq
    %v279 = vshrl.u32 %v278, 7
    %v280 = vsub.s32 1, %v279
    %v281 = vrot.slane %v272, %v280
    %v282 = vlaneseq
    %v283 = vshrl.u32 %v282, 7
    %v284 = vsub.s32 2, %v283
    %v285 = vrot.slane %v272, %v284
    %289 = vmatprep.subr.mxu0 %v261
    %290 = vmatpush1.msra.mxu0 %v260
    %291 = vmatprep.subr.mxu0 %v264
    %292 = vmatpush1.msra.mxu0 %v263
    %293 = vmatprep.subr.mxu0 %v267
    %294 = vmatpush1.msra.mxu0 %v266
    %295 = vmatprep.subr.mxu0 %v270
    %296 = vmatpush1.msra.mxu0 %v269
    %297 = vmatprep.subr.mxu0 0.0
    %298 = vmatpush1.msra.mxu0 0.0
    %299 = vmatprep.subr.mxu0 0.0
    %300 = vmatpush1.msra.mxu0 0.0
    %301 = vmatprep.subr.mxu0 0.0
    %302 = vmatpush1.msra.mxu0 0.0
    %303 = vmatprep.subr.mxu0 0.0
    %304 = vmatpush1.msra.mxu0 0.0
    %305 = vmatprep.subr.mxu0 0.0
    %306 = vmatpush1.msra.mxu0 0.0
    %307 = vmatprep.subr.mxu0 0.0
    %308 = vmatpush1.msra.mxu0 0.0
    %309 = vmatprep.subr.mxu0 0.0
    %310 = vmatpush1.msra.mxu0 0.0
    %311 = vmatprep.subr.mxu0 0.0
    %312 = vmatpush1.msra.mxu0 0.0
    %313 = vmatprep.subr.mxu0 0.0
    %314 = vmatpush1.msra.mxu0 0.0
    %315 = vmatprep.subr.mxu0 0.0
    %316 = vmatpush1.msra.mxu0 0.0
    %317 = vmatprep.subr.mxu0 0.0
    %318 = vmatpush1.msra.mxu0 0.0
    %319 = vmatprep.subr.mxu0 0.0
    %320 = vmatpush1.msra.mxu0 0.0
    %321 = vmatprep.subr.mxu0 0.0
    %322 = vmatpush1.msra.mxu0 0.0
    %323 = vmatprep.subr.mxu0 0.0
    %324 = vmatpush1.msra.mxu0 0.0
    %325 = vmatprep.subr.mxu0 0.0
    %326 = vmatpush1.msra.mxu0 0.0
    %327 = vmatprep.subr.mxu0 0.0
    %328 = vmatpush1.msra.mxu0 0.0
    %329 = vmatprep.subr.mxu0 0.0
    %330 = vmatpush1.msra.mxu0 0.0
    %331 = vmatprep.subr.mxu0 0.0
    %332 = vmatpush1.msra.mxu0 0.0
    %333 = vmatprep.subr.mxu0 0.0
    %334 = vmatpush1.msra.mxu0 0.0
    %335 = vmatprep.subr.mxu0 0.0
    %336 = vmatpush1.msra.mxu0 0.0
    %337 = vmatprep.subr.mxu0 0.0
    %338 = vmatpush1.msra.mxu0 0.0
    %339 = vmatprep.subr.mxu0 0.0
    %340 = vmatpush1.msra.mxu0 0.0
    %341 = vmatprep.subr.mxu0 0.0
    %342 = vmatpush1.msra.mxu0 0.0
    %343 = vmatprep.subr.mxu0 0.0
    %344 = vmatpush1.msra.mxu0 0.0
    %345 = vmatprep.subr.mxu0 0.0
    %346 = vmatpush1.msra.mxu0 0.0
    %347 = vmatprep.subr.mxu0 0.0
    %348 = vmatpush1.msra.mxu0 0.0
    %349 = vmatprep.subr.mxu0 0.0
    %350 = vmatpush1.msra.mxu0 0.0
    %351 = vmatprep.subr.mxu0 0.0
    %352 = vmatpush1.msra.mxu0 0.0
    %353 = vmatprep.mubr.f32.mxu0 0.0
    %354 = vmatmul.mubr.f32.gmra.mrb[0].mxu0 %v97
    %v355 = vpop.f32.mrb[0].mxu0
    %v356 = vadd.f32 %v277, %v355
    %v357 = vpop.f32.mrb[0].mxu0
    %v358 = vadd.f32 %v281, %v357
    %359 = vdwg.mxu0
    %360 = vmatprep.subr.mxu0 0.0
    %361 = vmatpush1.msra.mxu0 %v262
    %362 = vmatprep.subr.mxu0 0.0
    %363 = vmatpush1.msra.mxu0 %v265
    %364 = vmatprep.subr.mxu0 0.0
    %365 = vmatpush1.msra.mxu0 %v268
    %366 = vmatprep.subr.mxu0 0.0
    %367 = vmatpush1.msra.mxu0 %v271
    %368 = vmatprep.subr.mxu0 0.0
    %369 = vmatpush1.msra.mxu0 0.0
    %370 = vmatprep.subr.mxu0 0.0
    %371 = vmatpush1.msra.mxu0 0.0
    %372 = vmatprep.subr.mxu0 0.0
    %373 = vmatpush1.msra.mxu0 0.0
    %374 = vmatprep.subr.mxu0 0.0
    %375 = vmatpush1.msra.mxu0 0.0
    %376 = vmatprep.subr.mxu0 0.0
    %377 = vmatpush1.msra.mxu0 0.0
    %378 = vmatprep.subr.mxu0 0.0
    %379 = vmatpush1.msra.mxu0 0.0
    %380 = vmatprep.subr.mxu0 0.0
    %381 = vmatpush1.msra.mxu0 0.0
    %382 = vmatprep.subr.mxu0 0.0
    %383 = vmatpush1.msra.mxu0 0.0
    %384 = vmatprep.subr.mxu0 0.0
    %385 = vmatpush1.msra.mxu0 0.0
    %386 = vmatprep.subr.mxu0 0.0
    %387 = vmatpush1.msra.mxu0 0.0
    %388 = vmatprep.subr.mxu0 0.0
    %389 = vmatpush1.msra.mxu0 0.0
    %390 = vmatprep.subr.mxu0 0.0
    %391 = vmatpush1.msra.mxu0 0.0
    %392 = vmatprep.subr.mxu0 0.0
    %393 = vmatpush1.msra.mxu0 0.0
    %394 = vmatprep.subr.mxu0 0.0
    %395 = vmatpush1.msra.mxu0 0.0
    %396 = vmatprep.subr.mxu0 0.0
    %397 = vmatpush1.msra.mxu0 0.0
    %398 = vmatprep.subr.mxu0 0.0
    %399 = vmatpush1.msra.mxu0 0.0
    %400 = vmatprep.subr.mxu0 0.0
    %401 = vmatpush1.msra.mxu0 0.0
    %402 = vmatprep.subr.mxu0 0.0
    %403 = vmatpush1.msra.mxu0 0.0
    %404 = vmatprep.subr.mxu0 0.0
    %405 = vmatpush1.msra.mxu0 0.0
    %406 = vmatprep.subr.mxu0 0.0
    %407 = vmatpush1.msra.mxu0 0.0
    %408 = vmatprep.subr.mxu0 0.0
    %409 = vmatpush1.msra.mxu0 0.0
    %410 = vmatprep.subr.mxu0 0.0
    %411 = vmatpush1.msra.mxu0 0.0
    %412 = vmatprep.subr.mxu0 0.0
    %413 = vmatpush1.msra.mxu0 0.0
    %414 = vmatprep.subr.mxu0 0.0
    %415 = vmatpush1.msra.mxu0 0.0
    %416 = vmatprep.subr.mxu0 0.0
    %417 = vmatpush1.msra.mxu0 0.0
    %418 = vmatprep.subr.mxu0 0.0
    %419 = vmatpush1.msra.mxu0 0.0
    %420 = vmatprep.subr.mxu0 0.0
    %421 = vmatpush1.msra.mxu0 0.0
    %422 = vmatprep.subr.mxu0 0.0
    %423 = vmatpush1.msra.mxu0 0.0
    %424 = vmatprep.mubr.f32.mxu0 0.0
    %425 = vmatmul.mubr.f32.gmra.mrb[0].mxu0 %v97
    %v426 = vpop.f32.mrb[0].mxu0
    %v427 = vadd.f32 %v285, %v426
    %v428 = vpop.f32.mrb[0].mxu0
    %429 = vdwg.mxu0
    %vm430 = vcmp.lt.s32.totalorder %v179, 10
    %v431 = vsel %vm430, %v356, -1e+30
    %432 = vmax.xlane.f32.xlu0 %v431
    %v433 = vpop.xlane.xlu0 %432
    %v434 = vsub.f32 %v431, %v433
    %v435 = vmul.f32 %v434, 1.442695
    %v436 = vpow.pop %v435
    %437 = vadd.xlane.f32.xlu0 %v436
    %v438 = vpop.xlane.xlu0 %437
    %v439 = vlog2.pop %v438
    %v440 = vmul.f32 %v439, 0.6931472
    %v441 = vadd.f32 %v440, %v433
    %v442 = vsub.f32 %v356, %v441
    %443 = vst [vmem:[#allocation11 + $0x10] sm:$0xff] %v442
    %v444 = vmul.f32 %v358, 0.1
    %v445 = vtanh.pop %v444
    %v446 = vmul.f32 %v445, 10.0
    %447 = vst [vmem:[#allocation11 + $0x8] sm:$0xff] %v446
    %v448 = vmul.f32 %v427, 0.1
    %v449 = vtanh.pop %v448
    %v450 = vmul.f32 %v449, 10.0
    %v451 = vmul.f32 %v175, %v258
    %452 = vadd.xlane.f32.xlu0 %v451
    %v453 = vpop.xlane.xlu0 %452
    %v454 = vld [vmem:[#allocation8] sm:$0xff]
    %v455 = vld [vmem:[#allocation8 + $0x8] sm:$0xff]
    %v456 = vld [vmem:[#allocation8 + $0x10] sm:$0xff]
    %v457 = vld [vmem:[#allocation8 + $0x18] sm:$0xff]
    %v458 = vld [vmem:[#allocation8 + $0x20] sm:$0xff]
    %v459 = vld [vmem:[#allocation8 + $0x28] sm:$0xff]
    %v460 = vld [vmem:[#allocation8 + $0x30] sm:$0xff]
    %v461 = vld [vmem:[#allocation8 + $0x38] sm:$0xff]
    %v462 = vld [vmem:[#allocation8 + $0x40] sm:$0xff]
    %v463 = vld [vmem:[#allocation8 + $0x48] sm:$0xff]
    %v464 = vld [vmem:[#allocation8 + $0x50] sm:$0xff]
    %v465 = vld [vmem:[#allocation8 + $0x58] sm:$0xff]
    %v466 = vld [vmem:[#allocation8 + $0x60] sm:$0xff]
    %v467 = vld [vmem:[#allocation8 + $0x68] sm:$0xff]
    %v468 = vld [vmem:[#allocation8 + $0x70] sm:$0xff]
    %v469 = vld [vmem:[#allocation8 + $0x78] sm:$0xff]
    %470 = vmatprep.subr.mxu0 0.0
    %471 = vmatpush1.msra.mxu0 %v454
    %472 = vmatprep.subr.mxu0 0.0
    %473 = vmatpush1.msra.mxu0 %v455
    %474 = vmatprep.subr.mxu0 0.0
    %475 = vmatpush1.msra.mxu0 %v456
    %476 = vmatprep.subr.mxu0 0.0
    %477 = vmatpush1.msra.mxu0 %v457
    %478 = vmatprep.subr.mxu0 0.0
    %479 = vmatpush1.msra.mxu0 %v458
    %480 = vmatprep.subr.mxu0 0.0
    %481 = vmatpush1.msra.mxu0 %v459
    %482 = vmatprep.subr.mxu0 0.0
    %483 = vmatpush1.msra.mxu0 %v460
    %484 = vmatprep.subr.mxu0 0.0
    %485 = vmatpush1.msra.mxu0 %v461
    %486 = vmatprep.subr.mxu0 0.0
    %487 = vmatpush1.msra.mxu0 %v462
    %488 = vmatprep.subr.mxu0 0.0
    %489 = vmatpush1.msra.mxu0 %v463
    %490 = vmatprep.subr.mxu0 0.0
    %491 = vmatpush1.msra.mxu0 %v464
    %492 = vmatprep.subr.mxu0 0.0
    %493 = vmatpush1.msra.mxu0 %v465
    %494 = vmatprep.subr.mxu0 0.0
    %495 = vmatpush1.msra.mxu0 %v466
    %496 = vmatprep.subr.mxu0 0.0
    %497 = vmatpush1.msra.mxu0 %v467
    %498 = vmatprep.subr.mxu0 0.0
    %499 = vmatpush1.msra.mxu0 %v468
    %500 = vmatprep.subr.mxu0 0.0
    %501 = vmatpush1.msra.mxu0 %v469
    %502 = vmatprep.subr.mxu0 0.0
    %503 = vmatpush1.msra.mxu0 0.0
    %504 = vmatprep.subr.mxu0 0.0
    %505 = vmatpush1.msra.mxu0 0.0
    %506 = vmatprep.subr.mxu0 0.0
    %507 = vmatpush1.msra.mxu0 0.0
    %508 = vmatprep.subr.mxu0 0.0
    %509 = vmatpush1.msra.mxu0 0.0
    %510 = vmatprep.subr.mxu0 0.0
    %511 = vmatpush1.msra.mxu0 0.0
    %512 = vmatprep.subr.mxu0 0.0
    %513 = vmatpush1.msra.mxu0 0.0
    %514 = vmatprep.subr.mxu0 0.0
    %515 = vmatpush1.msra.mxu0 0.0
    %516 = vmatprep.subr.mxu0 0.0
    %517 = vmatpush1.msra.mxu0 0.0
    %518 = vmatprep.subr.mxu0 0.0
    %519 = vmatpush1.msra.mxu0 0.0
    %520 = vmatprep.subr.mxu0 0.0
    %521 = vmatpush1.msra.mxu0 0.0
    %522 = vmatprep.subr.mxu0 0.0
    %523 = vmatpush1.msra.mxu0 0.0
    %524 = vmatprep.subr.mxu0 0.0
    %525 = vmatpush1.msra.mxu0 0.0
    %526 = vmatprep.subr.mxu0 0.0
    %527 = vmatpush1.msra.mxu0 0.0
    %528 = vmatprep.subr.mxu0 0.0
    %529 = vmatpush1.msra.mxu0 0.0
    %530 = vmatprep.subr.mxu0 0.0
    %531 = vmatpush1.msra.mxu0 0.0
    %532 = vmatprep.subr.mxu0 0.0
    %533 = vmatpush1.msra.mxu0 0.0
    %534 = vmatprep.mubr.f32.mxu0 0.0
    %535 = vmatmul.mubr.f32.gmra.mrb[0].mxu0 %v451
    %v536 = vpop.f32.mrb[0].mxu0
    %v537 = vadd.f32 0.0, %v536
    %v538 = vpop.f32.mrb[0].mxu0
    %539 = vdwg.mxu0
    %v540 = vmul.f32 %v450, %v537
    %v541 = vld [vmem:[#allocation10] sm:$0xff]
    %v542 = vld [vmem:[#allocation10 + $0x8] sm:$0xff]
    %v543 = vld [vmem:[#allocation10 + $0x10] sm:$0xff]
    %v544 = vld [vmem:[#allocation10 + $0x18] sm:$0xff]
    %v545 = vld [vmem:[#allocation10 + $0x20] sm:$0xff]
    %v546 = vld [vmem:[#allocation10 + $0x28] sm:$0xff]
    %v547 = vld [vmem:[#allocation10 + $0x30] sm:$0xff]
    %v548 = vld [vmem:[#allocation10 + $0x38] sm:$0xff]
    %v549 = vld [vmem:[#allocation10 + $0x40] sm:$0xff]
    %v550 = vld [vmem:[#allocation10 + $0x48] sm:$0xff]
    %v551 = vld [vmem:[#allocation10 + $0x50] sm:$0xff]
    %v552 = vld [vmem:[#allocation10 + $0x58] sm:$0xff]
    %v553 = vld [vmem:[#allocation10 + $0x60] sm:$0xff]
    %v554 = vld [vmem:[#allocation10 + $0x68] sm:$0xff]
    %v555 = vld [vmem:[#allocation10 + $0x70] sm:$0xff]
    %v556 = vld [vmem:[#allocation10 + $0x78] sm:$0xff]
    %557 = vmatprep.subr.mxu0 0.0
    %558 = vmatpush1.msra.mxu0 %v541
    %559 = vmatprep.subr.mxu0 0.0
    %560 = vmatpush1.msra.mxu0 %v542
    %561 = vmatprep.subr.mxu0 0.0
    %562 = vmatpush1.msra.mxu0 %v543
    %563 = vmatprep.subr.mxu0 0.0
    %564 = vmatpush1.msra.mxu0 %v544
    %565 = vmatprep.subr.mxu0 0.0
    %566 = vmatpush1.msra.mxu0 %v545
    %567 = vmatprep.subr.mxu0 0.0
    %568 = vmatpush1.msra.mxu0 %v546
    %569 = vmatprep.subr.mxu0 0.0
    %570 = vmatpush1.msra.mxu0 %v547
    %571 = vmatprep.subr.mxu0 0.0
    %572 = vmatpush1.msra.mxu0 %v548
    %573 = vmatprep.subr.mxu0 0.0
    %574 = vmatpush1.msra.mxu0 %v549
    %575 = vmatprep.subr.mxu0 0.0
    %576 = vmatpush1.msra.mxu0 %v550
    %577 = vmatprep.subr.mxu0 0.0
    %578 = vmatpush1.msra.mxu0 %v551
    %579 = vmatprep.subr.mxu0 0.0
    %580 = vmatpush1.msra.mxu0 %v552
    %581 = vmatprep.subr.mxu0 0.0
    %582 = vmatpush1.msra.mxu0 %v553
    %583 = vmatprep.subr.mxu0 0.0
    %584 = vmatpush1.msra.mxu0 %v554
    %585 = vmatprep.subr.mxu0 0.0
    %586 = vmatpush1.msra.mxu0 %v555
    %587 = vmatprep.subr.mxu0 0.0
    %588 = vmatpush1.msra.mxu0 %v556
    %589 = vmatprep.subr.mxu0 0.0
    %590 = vmatpush1.msra.mxu0 0.0
    %591 = vmatprep.subr.mxu0 0.0
    %592 = vmatpush1.msra.mxu0 0.0
    %593 = vmatprep.subr.mxu0 0.0
    %594 = vmatpush1.msra.mxu0 0.0
    %595 = vmatprep.subr.mxu0 0.0
    %596 = vmatpush1.msra.mxu0 0.0
    %597 = vmatprep.subr.mxu0 0.0
    %598 = vmatpush1.msra.mxu0 0.0
    %599 = vmatprep.subr.mxu0 0.0
    %600 = vmatpush1.msra.mxu0 0.0
    %601 = vmatprep.subr.mxu0 0.0
    %602 = vmatpush1.msra.mxu0 0.0
    %603 = vmatprep.subr.mxu0 0.0
    %604 = vmatpush1.msra.mxu0 0.0
    %605 = vmatprep.subr.mxu0 0.0
    %606 = vmatpush1.msra.mxu0 0.0
    %607 = vmatprep.subr.mxu0 0.0
    %608 = vmatpush1.msra.mxu0 0.0
    %609 = vmatprep.subr.mxu0 0.0
    %610 = vmatpush1.msra.mxu0 0.0
    %611 = vmatprep.subr.mxu0 0.0
    %612 = vmatpush1.msra.mxu0 0.0
    %613 = vmatprep.subr.mxu0 0.0
    %614 = vmatpush1.msra.mxu0 0.0
    %615 = vmatprep.subr.mxu0 0.0
    %616 = vmatpush1.msra.mxu0 0.0
    %617 = vmatprep.subr.mxu0 0.0
    %618 = vmatpush1.msra.mxu0 0.0
    %619 = vmatprep.subr.mxu0 0.0
    %620 = vmatpush1.msra.mxu0 0.0
    %621 = vmatprep.mubr.f32.mxu0 0.0
    %622 = vmatmul.mubr.f32.gmra.mrb[0].mxu0 %v540
    %v623 = vpop.f32.mrb[0].mxu0
    %v624 = vadd.f32 0.0, %v623
    %v625 = vpop.f32.mrb[0].mxu0
    %626 = vdwg.mxu0
    %v627 = vrcp.pop %v453
    %v628 = vmul.f32 %v453, %v627
    %v629 = vsub.f32 2.0, %v628
    %v630 = vmul.f32 %v627, %v629
    %v631 = vmul.f32 %v624, %v630
    %632 = vst [vmem:[#allocation11] sm:$0xff] %v631
    // Predicated region
    $region46: #{tpu_custom_call.1} parent=1 // pred_check
      _
    $region47: #{tpu_custom_call.1} parent=1 // pred_check_branch
      %634 = sbr.rel (0) target = $region49
    $region48: #{tpu_custom_call.1} parent=1 // pred_region
      %s636 = ssub.s32 640, 640
      %637 = vsyncadd [#allocation4], %s636
      %s639 = sshll.u32 [#allocation11], 4
      %s640 = int_to_ptr.vmem [resolvable:$true] %s639
      %642 = dma.vmem_to_hbm [thread:$0]  %s640, 640, %s6, [#allocation4]
    $region49: #{tpu_custom_call.1} parent=1 // pred_fallthru
      _
    // Predicated region
    $region50: #{tpu_custom_call.1} parent=1 // pred_check
      _
    $region51: #{tpu_custom_call.1} parent=1 // pred_check_branch
      %644 = sbr.rel (0) target = $region53
    $region52: #{tpu_custom_call.1} parent=1 // pred_region
      %645 = dma.done [#allocation4], 640
    $region53: #{tpu_custom_call.1} parent=1 // pred_fallthru
      _
    %646 = vsyncpa [#allocation3], 1
    %647 = vsyncpa [#allocation6], 1
    %648 = vsyncpa [#allocation9], 1
    %649 = vsyncpa [#allocation4], 1

</llo_original>
